<compile_context>
chip_gen: v7x
topology: tpu7x:2x2x1
jax: 0.10.0
libtpu: 0.0.40
codegen_flags: <defaults>
</compile_context>

<pallas_src>
import jax
import jax.numpy as jnp
from jax import lax
from jax.experimental import pallas as pl
from jax.experimental.pallas import tpu as pltpu

HIGHEST = jax.lax.Precision.HIGHEST
BN_EPS = 1e-5


def _round_up(v, m):
    return -(-v // m) * m


def _cdiv(a, b):
    return -(-a // b)


def _pick_spatial_tile(S, rows_per_step, n_batch, *, max_tile=16384,
                       vmem_block_budget=12 * 1024 * 1024):
    """Largest multiple-of-128 spatial tile whose double-buffered f32 block set fits budget."""
    per_lane_bytes = 2 * rows_per_step * 4          # double-buffered, f32
    cap = max(128, min(max_tile, vmem_block_budget // per_lane_bytes))
    cap = (cap // 128) * 128
    t = min(cap, _round_up(S, 128))
    # keep >= 2 grid steps when possible so both v7x TensorCores get work
    if n_batch * _cdiv(S, t) < 2 and t > 128:
        t = max(128, _round_up(_cdiv(S, 2), 128))
    return t


def _vmem_limit(rows_per_step, tile, weight_bytes):
    """Right-sized VMEM limit: double-buffered blocks + resident weights + margin."""
    need = 2 * rows_per_step * tile * 4 + weight_bytes + (8 << 20)
    return int(min(need, 64 << 20))


# ----------------------------------------------------------------------------
# Kernel 1: coarse-resolution attention maps for BOTH gates in one call
#   sigmoid(psi_g(relu(theta_x_g + phi_g)))  — grid over (2N, So_pad // tSo)
#   layout: (1, CI, tSo) blocks — inter-channels on sublanes, coarse spatial on lanes.
# ----------------------------------------------------------------------------
def _attn_map_kernel(theta_ref, phi_ref, psiw_ref, psib_ref, attn_ref):
    f = jnp.maximum(theta_ref[0] + phi_ref[0], 0.0)               # (CI, tSo)
    s = jnp.dot(psiw_ref[0], f, precision=HIGHEST,
                preferred_element_type=jnp.float32)               # (1, tSo)
    attn_ref[0] = jax.nn.sigmoid(s + psib_ref[0]).astype(attn_ref.dtype)


def _coarse_attention(theta_both, phi_both, psi_w_both, psi_b_both, n_batch):
    # theta_both, phi_both: (2N, CI, So); psi_w_both: (2, 1, CI); psi_b_both: (2, 1, 1)
    B2, CI, So = theta_both.shape
    rows = 2 * CI + 1
    tS = _pick_spatial_tile(So, rows, B2)
    So_pad = _round_up(So, tS)
    if So_pad != So:
        pad = ((0, 0), (0, 0), (0, So_pad - So))
        theta_both = jnp.pad(theta_both, pad)
        phi_both = jnp.pad(phi_both, pad)

    wbytes = (psi_w_both.size + psi_b_both.size) * 4
    psi_map = lambda b, s: (b % 2, 0, 0)      # gate index (batch was stacked (n, gate))

    out = pl.pallas_call(
        _attn_map_kernel,
        out_shape=jax.ShapeDtypeStruct((B2, 1, So_pad), jnp.float32),
        grid_spec=pltpu.PrefetchScalarGridSpec(
            num_scalar_prefetch=0,
            grid=(B2, So_pad // tS),
            in_specs=[
                pl.BlockSpec((1, CI, tS), lambda b, s: (b, 0, s)),
                pl.BlockSpec((1, CI, tS), lambda b, s: (b, 0, s)),
                pl.BlockSpec((1, 1, CI), psi_map),
                pl.BlockSpec((1, 1, 1), psi_map),
            ],
            out_specs=pl.BlockSpec((1, 1, tS), lambda b, s: (b, 0, s)),
        ),
        compiler_params=pltpu.CompilerParams(
            dimension_semantics=("parallel", "parallel"),
            vmem_limit_bytes=_vmem_limit(rows, tS, wbytes),
        ),
    )(theta_both, phi_both, psi_w_both, psi_b_both)
    if So_pad != So:
        out = out[:, :, :So]
    return out


# ----------------------------------------------------------------------------
# Kernel 2: fused full-resolution hot path
#   out = relu( M1 @ (a1*x) + M2 @ (a2*x) + b_eff )
#   (per-gate W convs, both BatchNorms and the combine conv+BN folded into M1/M2/b_eff)
# ----------------------------------------------------------------------------
def _gate_combine_kernel(x_ref, a_ref, m1_ref, m2_ref, beff_ref, o_ref):
    x = x_ref[0]                                                  # (C, tS)
    a = a_ref[0]                                                  # (2, tS)
    a1 = a[0:1, :]
    a2 = a[1:2, :]
    z = (jnp.dot(m1_ref[...], x * a1, precision=HIGHEST,
                 preferred_element_type=jnp.float32)
         + jnp.dot(m2_ref[...], x * a2, precision=HIGHEST,
                   preferred_element_type=jnp.float32)
         + beff_ref[...])
    o_ref[0] = jnp.maximum(z, 0.0).astype(o_ref.dtype)


def _gate_and_combine(x_flat, a_flat, m1, m2, b_eff):
    # x_flat: (N, C, S); a_flat: (N, 2, S); m1/m2: (C, C); b_eff: (C, 1)
    N, C, S = x_flat.shape
    rows = 2 * C + 2                                 # x block + a block + out block rows
    tS = _pick_spatial_tile(S, rows, N)
    S_pad = _round_up(S, tS)
    if S_pad != S:
        pad = ((0, 0), (0, 0), (0, S_pad - S))
        x_flat = jnp.pad(x_flat, pad)
        a_flat = jnp.pad(a_flat, pad)

    wbytes = (m1.size + m2.size + b_eff.size) * 4
    const = lambda n, s: (0, 0)

    out = pl.pallas_call(
        _gate_combine_kernel,
        out_shape=jax.ShapeDtypeStruct((N, C, S_pad), x_flat.dtype),
        grid_spec=pltpu.PrefetchScalarGridSpec(
            num_scalar_prefetch=0,
            grid=(N, S_pad // tS),
            in_specs=[
                pl.BlockSpec((1, C, tS), lambda n, s: (n, 0, s)),
                pl.BlockSpec((1, 2, tS), lambda n, s: (n, 0, s)),
                pl.BlockSpec((C, C), const),
                pl.BlockSpec((C, C), const),
                pl.BlockSpec((C, 1), const),
            ],
            out_specs=pl.BlockSpec((1, C, tS), lambda n, s: (n, 0, s)),
        ),
        compiler_params=pltpu.CompilerParams(
            dimension_semantics=("parallel", "parallel"),
            vmem_limit_bytes=_vmem_limit(rows, tS, wbytes),
        ),
    )(x_flat, a_flat, m1, m2, b_eff)
    if S_pad != S:
        out = out[:, :, :S]
    return out


# ----------------------------------------------------------------------------
# Glue + parameter folding
# ----------------------------------------------------------------------------
def _fuse_conv_bn(w, b, gamma, beta, mean, var, eps=BN_EPS):
    # 1x1x1 conv (Cout, Cin) + bias, followed by eval-mode BatchNorm -> single affine.
    scale = gamma / jnp.sqrt(var + eps)
    w_eff = w * scale[:, None]
    b_eff = scale * b + (beta - scale * mean)
    return w_eff, b_eff[:, None]  # bias as (Cout, 1) for lane broadcast in-kernel


def _coarse_inputs(x, g, p):
    """theta_x and upsampled phi_g for one GridAttentionBlock3D (coarse resolution)."""
    N = x.shape[0]
    CI = p["theta_w"].shape[0]
    # TODO(synk): theta (kernel==stride) Conv3d is left to lax.conv glue — it is a pure
    # patchify+matmul at 1/8 resolution, off the Pallas hot path.
    theta_x = lax.conv_general_dilated(
        x, p["theta_w"], window_strides=p["sub"], padding="VALID",
        dimension_numbers=("NCDHW", "OIDHW", "NCDHW"), precision=HIGHEST)
    Do, Ho, Wo = theta_x.shape[2:]
    phi_g = (jnp.einsum("oc,ncdhw->nodhw", p["phi_w"], g, precision=HIGHEST)
             + p["phi_b"][None, :, None, None, None])
    # TODO(synk): trilinear F.interpolate has no clean static-tile Pallas mapping; done
    # with jax.image.resize in the XLA glue.
    phi_up = jax.image.resize(phi_g, (N, CI, Do, Ho, Wo), method="trilinear")
    return theta_x, phi_up


def multi_attention_block(x, g, params):
    """x: (N, C, D, H, W); g: (N, GC, Dg, Hg, Wg). Returns (out, cat(attn1, attn2))."""
    N, C, D, H, W = x.shape
    S = D * H * W
    p1, p2, pc = params["gate1"], params["gate2"], params["combine"]

    # --- coarse attention for BOTH gates in one Pallas call -------------------
    t1, ph1 = _coarse_inputs(x, g, p1)
    t2, ph2 = _coarse_inputs(x, g, p2)
    CI = t1.shape[1]
    Do, Ho, Wo = t1.shape[2:]
    So = Do * Ho * Wo
    theta_both = jnp.stack([t1, t2], axis=1).reshape(2 * N, CI, So).astype(jnp.float32)
    phi_both = jnp.stack([ph1, ph2], axis=1).reshape(2 * N, CI, So).astype(jnp.float32)
    psi_w_both = jnp.stack([p1["psi_w"], p2["psi_w"]], axis=0)    # (2, 1, CI)
    psi_b_both = jnp.stack([p1["psi_b"], p2["psi_b"]], axis=0)    # (2, 1, 1)

    attn_coarse = _coarse_attention(theta_both, phi_both, psi_w_both, psi_b_both, N)
    attn_coarse = attn_coarse.reshape(N, 2, Do, Ho, Wo)
    # one trilinear resize for both maps; this array IS the returned cat(attn1, attn2)
    attn_full = jax.image.resize(attn_coarse, (N, 2, D, H, W), method="trilinear")

    # --- fold gate convs + BNs + combine conv + BN into M1/M2/b_eff -----------
    # TODO(synk): BatchNorm3d implemented in eval mode (running stats folded into the
    # 1x1 convs); train-mode batch statistics would need an extra cross-batch reduction.
    w1, b1 = _fuse_conv_bn(p1["w_w"], p1["w_b"], p1["bn_gamma"], p1["bn_beta"],
                           p1["bn_mean"], p1["bn_var"])
    w2, b2 = _fuse_conv_bn(p2["w_w"], p2["w_b"], p2["bn_gamma"], p2["bn_beta"],
                           p2["bn_mean"], p2["bn_var"])
    wc, bc = _fuse_conv_bn(pc["w"], pc["b"], pc["bn_gamma"], pc["bn_beta"],
                           pc["bn_mean"], pc["bn_var"])
    wc1, wc2 = wc[:, :C], wc[:, C:]
    m1 = jnp.dot(wc1, w1, precision=HIGHEST)
    m2 = jnp.dot(wc2, w2, precision=HIGHEST)
    b_eff = (jnp.dot(wc1, b1, precision=HIGHEST)
             + jnp.dot(wc2, b2, precision=HIGHEST) + bc)          # (C, 1)

    # --- fused hot path --------------------------------------------------------
    out_flat = _gate_and_combine(
        x.reshape(N, C, S),
        attn_full.reshape(N, 2, S).astype(jnp.float32),
        m1, m2, b_eff)

    return out_flat.reshape(N, C, D, H, W), attn_full


# ----------------------------------------------------------------------------
# Pure-JAX reference (mirrors the PyTorch forward, BN in eval mode, not fused)
# ----------------------------------------------------------------------------
def _conv1x1_ref(z, w, b=None):
    out = jnp.einsum("oc,ncdhw->nodhw", w, z, precision=HIGHEST)
    if b is not None:
        out = out + b[None, :, None, None, None]
    return out


def _bn_eval_ref(z, gamma, beta, mean, var, eps=BN_EPS):
    scale = gamma / jnp.sqrt(var + eps)
    shift = beta - scale * mean
    return z * scale[None, :, None, None, None] + shift[None, :, None, None, None]


def _attention_map_ref(x, g, p):
    N, C, D, H, W = x.shape
    CI = p["theta_w"].shape[0]
    theta_x = lax.conv_general_dilated(
        x, p["theta_w"], window_strides=p["sub"], padding="VALID",
        dimension_numbers=("NCDHW", "OIDHW", "NCDHW"), precision=HIGHEST)
    Do, Ho, Wo = theta_x.shape[2:]
    phi_g = _conv1x1_ref(g, p["phi_w"], p["phi_b"])
    phi_up = jax.image.resize(phi_g, (N, CI, Do, Ho, Wo), method="trilinear")
    f = jax.nn.relu(theta_x + phi_up)
    psi_f = _conv1x1_ref(f, p["psi_w"]) + p["psi_b"][0, 0]
    sigm = jax.nn.sigmoid(psi_f)
    return jax.image.resize(sigm, (N, 1, D, H, W), method="trilinear")


def multi_attention_block_ref(x, g, params):
    p1, p2, pc = params["gate1"], params["gate2"], params["combine"]
    a1 = _attention_map_ref(x, g, p1)
    a2 = _attention_map_ref(x, g, p2)
    gate1 = _bn_eval_ref(_conv1x1_ref(a1 * x, p1["w_w"], p1["w_b"]),
                         p1["bn_gamma"], p1["bn_beta"], p1["bn_mean"], p1["bn_var"])
    gate2 = _bn_eval_ref(_conv1x1_ref(a2 * x, p2["w_w"], p2["w_b"]),
                         p2["bn_gamma"], p2["bn_beta"], p2["bn_mean"], p2["bn_var"])
    cat = jnp.concatenate([gate1, gate2], axis=1)
    out = jax.nn.relu(_bn_eval_ref(_conv1x1_ref(cat, pc["w"], pc["b"]),
                                   pc["bn_gamma"], pc["bn_beta"],
                                   pc["bn_mean"], pc["bn_var"]))
    return out, jnp.concatenate([a1, a2], axis=1)


# ----------------------------------------------------------------------------
if __name__ == "__main__":
    # MultiAttentionBlock(in_size=16, gate_size=32, inter_size=8,
    #                     nonlocal_mode='concatenation', sub_sample_factor=(2,2,2))
    N, C, GC, CI = 2, 16, 32, 8
    D = H = W = 16
    Dg = Hg = Wg = 4
    sub = (2, 2, 2)

    keys = iter(jax.random.split(jax.random.PRNGKey(0), 40))

    def nrm(shape, scale=0.1):
        return scale * jax.random.normal(next(keys), shape, dtype=jnp.float32)

    x = jax.random.normal(next(keys), (N, C, D, H, W), dtype=jnp.float32)
    g = jax.random.normal(next(keys), (N, GC, Dg, Hg, Wg), dtype=jnp.float32)

    def make_gate_params():
        return dict(
            sub=sub,
            theta_w=nrm((CI, C) + sub, 0.2),                 # Conv3d weight (O,I,kd,kh,kw)
            phi_w=nrm((CI, GC), 0.2), phi_b=nrm((CI,), 0.1),
            psi_w=nrm((1, CI), 0.3), psi_b=nrm((1, 1), 0.1),
            w_w=nrm((C, C), 0.2), w_b=nrm((C,), 0.1),
            bn_gamma=1.0 + nrm((C,), 0.05), bn_beta=nrm((C,), 0.05),
            bn_mean=nrm((C,), 0.1), bn_var=1.0 + jnp.abs(nrm((C,), 0.1)),
        )

    params = dict(
        gate1=make_gate_params(),
        gate2=make_gate_params(),
        combine=dict(
            w=nrm((C, 2 * C), 0.2), b=nrm((C,), 0.1),
            bn_gamma=1.0 + nrm((C,), 0.05), bn_beta=nrm((C,), 0.05),
            bn_mean=nrm((C,), 0.1), bn_var=1.0 + jnp.abs(nrm((C,), 0.1)),
        ),
    )

    out, attn = multi_attention_block(x, g, params)
    out = jax.block_until_ready(out)
    attn = jax.block_until_ready(attn)

    out_ref, attn_ref = multi_attention_block_ref(x, g, params)
    ok_out = jnp.allclose(out, out_ref, atol=1e-3, rtol=1e-3)
    ok_attn = jnp.allclose(attn, attn_ref, atol=1e-3, rtol=1e-3)
    if not (bool(ok_out) and bool(ok_attn)):
        raise AssertionError("Pallas MultiAttentionBlock output mismatch vs reference")

    print("KERNEL_OK")
</pallas_src>

<mosaic_0001>
module attributes {stable_mosaic.version = 11 : i64} {
  func.func @_attn_map_kernel(%arg0: i32, %arg1: i32, %arg2: memref<1x8x512xf32, #tpu.memory_space<vmem>>, %arg3: memref<1x8x512xf32, #tpu.memory_space<vmem>>, %arg4: memref<1x1x8xf32, #tpu.memory_space<vmem>>, %arg5: memref<1x1x1xf32, #tpu.memory_space<vmem>>, %arg6: memref<1x1x512xf32, #tpu.memory_space<vmem>>) attributes {dimension_semantics = [#tpu.dimension_semantics<parallel>, #tpu.dimension_semantics<parallel>], iteration_bounds = array<i64: 4, 1>, scalar_prefetch = 0 : i64, scratch_operands = 0 : i64, tpu.core_type = #tpu.core_type<tc>, window_params = [{transform_indices = @transform_0, window_bounds = array<i64: 1, 8, 512>}, {transform_indices = @transform_1, window_bounds = array<i64: 1, 8, 512>}, {transform_indices = @transform_2, window_bounds = array<i64: 1, 1, 8>}, {transform_indices = @transform_3, window_bounds = array<i64: 1, 1, 1>}, {transform_indices = @transform_4, window_bounds = array<i64: 1, 1, 512>}]} {
    %c0 = arith.constant 0 : index
    %c0_0 = arith.constant 0 : index
    %c0_1 = arith.constant 0 : index
    %0 = vector.load %arg2[%c0, %c0_0, %c0_1] : memref<1x8x512xf32, #tpu.memory_space<vmem>>, vector<1x8x512xf32>
    %1 = vector.shape_cast %0 : vector<1x8x512xf32> to vector<8x512xf32>
    %c0_2 = arith.constant 0 : index
    %c0_3 = arith.constant 0 : index
    %c0_4 = arith.constant 0 : index
    %2 = vector.load %arg3[%c0_2, %c0_3, %c0_4] : memref<1x8x512xf32, #tpu.memory_space<vmem>>, vector<1x8x512xf32>
    %3 = vector.shape_cast %2 : vector<1x8x512xf32> to vector<8x512xf32>
    %4 = arith.addf %1, %3 : vector<8x512xf32>
    %cst = arith.constant 0.000000e+00 : f32
    %5 = vector.broadcast %cst : f32 to vector<8x512xf32>
    %6 = arith.maximumf %4, %5 : vector<8x512xf32>
    %c0_5 = arith.constant 0 : index
    %c0_6 = arith.constant 0 : index
    %c0_7 = arith.constant 0 : index
    %7 = vector.load %arg4[%c0_5, %c0_6, %c0_7] : memref<1x1x8xf32, #tpu.memory_space<vmem>>, vector<1x1x8xf32>
    %8 = vector.shape_cast %7 : vector<1x1x8xf32> to vector<1x8xf32>
    %cst_8 = arith.constant dense<0.000000e+00> : vector<1x512xf32>
    %9 = tpu.matmul %8, %6, %cst_8 {dimension_numbers = #tpu.dot_dimension_numbers<[1], [0], [0], [1], [0, 0, 1, 1], [], []>, precision = #tpu.contract_precision<fp32>} : vector<1x8xf32>, vector<8x512xf32>, vector<1x512xf32> -> vector<1x512xf32>
    %c0_9 = arith.constant 0 : index
    %c0_10 = arith.constant 0 : index
    %c0_11 = arith.constant 0 : index
    %10 = vector.load %arg5[%c0_9, %c0_10, %c0_11] : memref<1x1x1xf32, #tpu.memory_space<vmem>>, vector<1x1x1xf32>
    %11 = vector.shape_cast %10 : vector<1x1x1xf32> to vector<1x1xf32>
    %12 = vector.broadcast %11 : vector<1x1xf32> to vector<1x512xf32>
    %13 = arith.addf %9, %12 : vector<1x512xf32>
    %14 = arith.negf %13 : vector<1x512xf32>
    %15 = math.exp %14 : vector<1x512xf32>
    %cst_12 = arith.constant 1.000000e+00 : f32
    %16 = vector.broadcast %cst_12 : f32 to vector<1x512xf32>
    %17 = arith.addf %16, %15 : vector<1x512xf32>
    %18 = arith.divf %16, %17 : vector<1x512xf32>
    %c0_13 = arith.constant 0 : index
    %c0_14 = arith.constant 0 : index
    %c0_15 = arith.constant 0 : index
    %19 = vector.load %arg6[%c0_13, %c0_14, %c0_15] : memref<1x1x512xf32, #tpu.memory_space<vmem>>, vector<1x1x512xf32>
    %20 = vector.shape_cast %19 : vector<1x1x512xf32> to vector<1x512xf32>
    %21 = vector.shape_cast %18 : vector<1x512xf32> to vector<1x1x512xf32>
    tpu.vector_store %arg6[%c0_13, %c0_14, %c0_15], %21 {strides = array<i32>} : memref<1x1x512xf32, #tpu.memory_space<vmem>>, vector<1x1x512xf32>,
    return
  }
  func.func @transform_0(%arg0: i32, %arg1: i32) -> (i32, i32, i32) {
    %c0_i32 = arith.constant 0 : i32
    %c0_i32_0 = arith.constant 0 : i32
    return %arg0, %c0_i32, %arg1 : i32, i32, i32
  }
  func.func @transform_1(%arg0: i32, %arg1: i32) -> (i32, i32, i32) {
    %c0_i32 = arith.constant 0 : i32
    %c0_i32_0 = arith.constant 0 : i32
    return %arg0, %c0_i32, %arg1 : i32, i32, i32
  }
  func.func @transform_2(%arg0: i32, %arg1: i32) -> (i32, i32, i32) {
    %c2_i32 = arith.constant 2 : i32
    %c0_i32 = arith.constant 0 : i32
    %0 = arith.cmpi eq, %c2_i32, %c0_i32 : i32
    %c1_i32 = arith.constant 1 : i32
    %1 = arith.select %0, %c1_i32, %c2_i32 : i32
    %2 = arith.remsi %arg0, %1 : i32
    %c0_i32_0 = arith.constant 0 : i32
    %3 = arith.cmpi ne, %2, %c0_i32_0 : i32
    %c0_i32_1 = arith.constant 0 : i32
    %4 = arith.cmpi slt, %2, %c0_i32_1 : i32
    %c0_i32_2 = arith.constant 0 : i32
    %5 = arith.cmpi slt, %1, %c0_i32_2 : i32
    %6 = arith.xori %4, %5 : i1
    %7 = arith.andi %6, %3 : i1
    %8 = arith.addi %2, %1 : i32
    %9 = arith.select %7, %8, %2 : i32
    %c0_i32_3 = arith.constant 0 : i32
    %c0_i32_4 = arith.constant 0 : i32
    %c0_i32_5 = arith.constant 0 : i32
    return %9, %c0_i32_3, %c0_i32_4 : i32, i32, i32
  }
  func.func @transform_3(%arg0: i32, %arg1: i32) -> (i32, i32, i32) {
    %c2_i32 = arith.constant 2 : i32
    %c0_i32 = arith.constant 0 : i32
    %0 = arith.cmpi eq, %c2_i32, %c0_i32 : i32
    %c1_i32 = arith.constant 1 : i32
    %1 = arith.select %0, %c1_i32, %c2_i32 : i32
    %2 = arith.remsi %arg0, %1 : i32
    %c0_i32_0 = arith.constant 0 : i32
    %3 = arith.cmpi ne, %2, %c0_i32_0 : i32
    %c0_i32_1 = arith.constant 0 : i32
    %4 = arith.cmpi slt, %2, %c0_i32_1 : i32
    %c0_i32_2 = arith.constant 0 : i32
    %5 = arith.cmpi slt, %1, %c0_i32_2 : i32
    %6 = arith.xori %4, %5 : i1
    %7 = arith.andi %6, %3 : i1
    %8 = arith.addi %2, %1 : i32
    %9 = arith.select %7, %8, %2 : i32
    %c0_i32_3 = arith.constant 0 : i32
    %c0_i32_4 = arith.constant 0 : i32
    %c0_i32_5 = arith.constant 0 : i32
    return %9, %c0_i32_3, %c0_i32_4 : i32, i32, i32
  }
  func.func @transform_4(%arg0: i32, %arg1: i32) -> (i32, i32, i32) {
    %c0_i32 = arith.constant 0 : i32
    %c0_i32_0 = arith.constant 0 : i32
    return %arg0, %c0_i32, %arg1 : i32, i32, i32
  }
}

</mosaic_0001>

<llo_original>
// kernel: tpu_custom_call.1
$region0: #{tpu_custom_call.1}
  #allocation0 [shape = 'u32[]', space=smem, size = 0x4, offset = 0x4, fixed_abs, tag = 'smem constant byte address 0x4 - core index']
  #allocation1 [shape = 'u32[144,128]{1,0:T(1,128)}', space=vmem, size = 0x12000, scoped, tag = 'internal scratch']
  %s0 = inlined_call_operand.hbm [shape: f32[4,8,512], index: 0, kind: input, shape index: {}]
  %s1 = inlined_call_operand.hbm [shape: f32[4,8,512], index: 1, kind: input, shape index: {}]
  %s2 = inlined_call_operand.vmem [shape: f32[2,1,8], index: 2, kind: input, shape index: {}]
  %s3 = inlined_call_operand.vmem [shape: f32[2,1,1], index: 3, kind: input, shape index: {}]
  %s4 = inlined_call_operand.hbm [shape: f32[4,1,512], index: 4, kind: output, shape index: {}]
  %s5 = sld [smem:[#allocation0]]
  $region57: #{tpu_custom_call.1} parent=0
    _
  %s7 = ssub.s32 1, %s5
  %s8 = scalar_select 0, %s7, %s5
  $region1: #{tpu_custom_call.1} parent=0
    #allocation2 [shape = 'u8[32768]{0}', space=vmem, size = 0x8000, scoped, tag = 'input window, operand 0']
    #allocation3 [shape = 's32[2]{0}', space=sflag, size = 0x8, scoped, tag = 'scoped memory for tpu_custom_call.1']
    #allocation4 [shape = 's32[2]{0}', space=sflag, size = 0x8, scoped, tag = 'scoped memory for tpu_custom_call.1']
    #allocation5 [shape = 'u8[32768]{0}', space=vmem, size = 0x8000, scoped, tag = 'input window, operand 1']
    #allocation6 [shape = 's32[2]{0}', space=sflag, size = 0x8, scoped, tag = 'scoped memory for tpu_custom_call.1']
    #allocation7 [shape = 'u8[4096]{0}', space=vmem, size = 0x1000, scoped, tag = 'output window, operand 0']
    %9 = vsyncpa [#allocation3], 0
    %s10 = scalar_lea.sflag [#allocation3], 1
    %11 = vsyncpa %s10, 0
    %12 = vsyncpa [#allocation6], 0
    %s13 = scalar_lea.sflag [#allocation6], 1
    %14 = vsyncpa %s13, 0
    %15 = vsyncpa [#allocation4], 0
    %s16 = scalar_lea.sflag [#allocation4], 1
    %17 = vsyncpa %s16, 0
    loop: start=0, step=1, limit=6
    $region2: #{tpu_custom_call.1} parent=1 // loop_pre_header
      _
    $region3: #{tpu_custom_call.1} parent=1 // loop_header
      %s19 = sphi 0, %s23
      %p20 = scmp.ge.s32.totalorder %s19, 6
      %s26 = sphi 0, %s38
      %s27 = sphi 0, %s34
      %s28 = sphi 0, %s26
      %s29 = sphi 0, %s27
      %s30 = sphi 0, %s28
      %s31 = sphi 0, %s29
      %s43 = sphi 0, %s45
      %s46 = sphi 0, %s43
      %s47 = sphi 0, %s46
      %s63 = sphi 0, %s47
      %s71 = sphi 0, %s73
      %s74 = sphi 0, %s71
      %s75 = sphi 0, %s74
      %s91 = sphi 0, %s75
      %s121 = sphi 0, %s123
      %s124 = sphi 0, %s121
      %s125 = sphi 0, %s124
      %s141 = sphi 0, %s125
      %s171 = sphi 0, %s173
      %s174 = sphi 0, %s171
      %s175 = sphi 0, %s174
      %s191 = sphi 0, %s175
      %s199 = sphi 0, %s201
      %s202 = sphi 0, %s199
      %s203 = sphi 0, %s202
      %s219 = sphi 0, %s203
    $region4: #{tpu_custom_call.1} parent=1 // loop_header_branch
      %22 = sbr.rel (%p20) target = $region8
    $region5: #{tpu_custom_call.1} parent=1 // loop_body
      %s24 = ssub.s32 %s19, 1
      %s25 = ssub.s32 %s19, 2
      %s32 = sadd.s32 1, %s27
      %p33 = scmp.ge.s32.totalorder %s32, 1
      %s34 = scalar_select %p33, 0, %s32
      %s35 = sadd.s32 1, %s26
      %s36 = scalar_select %p33, %s35, %s26
      %p37 = scmp.ge.s32.totalorder %s36, 4
      %s38 = scalar_select %p37, 0, %s36
      %s39 = ssub.s32 %s26, %s38
      %s40 = ssub.s32 %s27, %s34
      %s41 = sor.u32 %s39, %s40
      %p42 = scmp.eq.s32.totalorder %s41, 0
      %s44 = sadd.s32 %s43, 1
      %s45 = scalar_select %p42, %s43, %s44
      %p48 = pneg %p42
      %p49 = scmp.eq.s32.totalorder %s19, 3
      %p50 = por %p48, %p49
      %p51 = scmp.ne.s32.totalorder %s43, %s46
      %p52 = scmp.eq.s32.totalorder %s19, 0
      %p53 = por %p51, %p52
      %p54 = scmp.ne.s32.totalorder %s43, %s46
      %p55 = scmp.eq.s32.totalorder %s24, 3
      %p56 = por %p54, %p55
      %p57 = scmp.ne.s32.totalorder %s46, %s47
      %p58 = scmp.eq.s32.totalorder %s24, 0
      %p59 = por %p57, %p58
      %p60 = scmp.ne.s32.totalorder %s46, %s47
      %p61 = scmp.eq.s32.totalorder %s25, 3
      %p62 = por %p60, %p61
      %p64 = scmp.ne.s32.totalorder %s47, %s63
      %p65 = scmp.eq.s32.totalorder %s25, 0
      %p66 = por %p64, %p65
      %s67 = ssub.s32 %s26, %s38
      %s68 = ssub.s32 %s27, %s34
      %s69 = sor.u32 %s67, %s68
      %p70 = scmp.eq.s32.totalorder %s69, 0
      %s72 = sadd.s32 %s71, 1
      %s73 = scalar_select %p70, %s71, %s72
      %p76 = pneg %p70
      %p77 = scmp.eq.s32.totalorder %s19, 3
      %p78 = por %p76, %p77
      %p79 = scmp.ne.s32.totalorder %s71, %s74
      %p80 = scmp.eq.s32.totalorder %s19, 0
      %p81 = por %p79, %p80
      %p82 = scmp.ne.s32.totalorder %s71, %s74
      %p83 = scmp.eq.s32.totalorder %s24, 3
      %p84 = por %p82, %p83
      %p85 = scmp.ne.s32.totalorder %s74, %s75
      %p86 = scmp.eq.s32.totalorder %s24, 0
      %p87 = por %p85, %p86
      %p88 = scmp.ne.s32.totalorder %s74, %s75
      %p89 = scmp.eq.s32.totalorder %s25, 3
      %p90 = por %p88, %p89
      %p92 = scmp.ne.s32.totalorder %s75, %s91
      %p93 = scmp.eq.s32.totalorder %s25, 0
      %p94 = por %p92, %p93
      %p95 = scmp.lt.s32.totalorder %s26, 0
      %s96 = ssub.s32 0, %s26
      %s97 = scalar_select %p95, %s96, %s26
      %s98 = sand.u32 %s97, 1
      %s99 = ssub.s32 0, %s98
      %s100 = scalar_select %p95, %s99, %s98
      %p101 = scmp.ne.s32.totalorder %s100, 0
      %p102 = scmp.lt.s32.totalorder %s100, 0
      %p103 = pnand %p102, %p101
      %p104 = pneg %p103
      %s105 = sadd.s32 %s100, 2
      %s106 = scalar_select %p104, %s105, %s100
      %p107 = scmp.lt.s32.totalorder %s38, 0
      %s108 = ssub.s32 0, %s38
      %s109 = scalar_select %p107, %s108, %s38
      %s110 = sand.u32 %s109, 1
      %s111 = ssub.s32 0, %s110
      %s112 = scalar_select %p107, %s111, %s110
      %p113 = scmp.ne.s32.totalorder %s112, 0
      %p114 = scmp.lt.s32.totalorder %s112, 0
      %p115 = pnand %p114, %p113
      %p116 = pneg %p115
      %s117 = sadd.s32 %s112, 2
      %s118 = scalar_select %p116, %s117, %s112
      %s119 = ssub.s32 %s106, %s118
      %p120 = scmp.eq.s32.totalorder %s119, 0
      %s122 = sadd.s32 %s121, 1
      %s123 = scalar_select %p120, %s121, %s122
      %p126 = pneg %p120
      %p127 = scmp.eq.s32.totalorder %s19, 3
      %p128 = por %p126, %p127
      %p129 = scmp.ne.s32.totalorder %s121, %s124
      %p130 = scmp.eq.s32.totalorder %s19, 0
      %p131 = por %p129, %p130
      %p132 = scmp.ne.s32.totalorder %s121, %s124
      %p133 = scmp.eq.s32.totalorder %s24, 3
      %p134 = por %p132, %p133
      %p135 = scmp.ne.s32.totalorder %s124, %s125
      %p136 = scmp.eq.s32.totalorder %s24, 0
      %p137 = por %p135, %p136
      %p138 = scmp.ne.s32.totalorder %s124, %s125
      %p139 = scmp.eq.s32.totalorder %s25, 3
      %p140 = por %p138, %p139
      %p142 = scmp.ne.s32.totalorder %s125, %s141
      %p143 = scmp.eq.s32.totalorder %s25, 0
      %p144 = por %p142, %p143
      %p145 = scmp.lt.s32.totalorder %s26, 0
      %s146 = ssub.s32 0, %s26
      %s147 = scalar_select %p145, %s146, %s26
      %s148 = sand.u32 %s147, 1
      %s149 = ssub.s32 0, %s148
      %s150 = scalar_select %p145, %s149, %s148
      %p151 = scmp.ne.s32.totalorder %s150, 0
      %p152 = scmp.lt.s32.totalorder %s150, 0
      %p153 = pnand %p152, %p151
      %p154 = pneg %p153
      %s155 = sadd.s32 %s150, 2
      %s156 = scalar_select %p154, %s155, %s150
      %p157 = scmp.lt.s32.totalorder %s38, 0
      %s158 = ssub.s32 0, %s38
      %s159 = scalar_select %p157, %s158, %s38
      %s160 = sand.u32 %s159, 1
      %s161 = ssub.s32 0, %s160
      %s162 = scalar_select %p157, %s161, %s160
      %p163 = scmp.ne.s32.totalorder %s162, 0
      %p164 = scmp.lt.s32.totalorder %s162, 0
      %p165 = pnand %p164, %p163
      %p166 = pneg %p165
      %s167 = sadd.s32 %s162, 2
      %s168 = scalar_select %p166, %s167, %s162
      %s169 = ssub.s32 %s156, %s168
      %p170 = scmp.eq.s32.totalorder %s169, 0
      %s172 = sadd.s32 %s171, 1
      %s173 = scalar_select %p170, %s171, %s172
      %p176 = pneg %p170
      %p177 = scmp.eq.s32.totalorder %s19, 3
      %p178 = por %p176, %p177
      %p179 = scmp.ne.s32.totalorder %s171, %s174
      %p180 = scmp.eq.s32.totalorder %s19, 0
      %p181 = por %p179, %p180
      %p182 = scmp.ne.s32.totalorder %s171, %s174
      %p183 = scmp.eq.s32.totalorder %s24, 3
      %p184 = por %p182, %p183
      %p185 = scmp.ne.s32.totalorder %s174, %s175
      %p186 = scmp.eq.s32.totalorder %s24, 0
      %p187 = por %p185, %p186
      %p188 = scmp.ne.s32.totalorder %s174, %s175
      %p189 = scmp.eq.s32.totalorder %s25, 3
      %p190 = por %p188, %p189
      %p192 = scmp.ne.s32.totalorder %s175, %s191
      %p193 = scmp.eq.s32.totalorder %s25, 0
      %p194 = por %p192, %p193
      %s195 = ssub.s32 %s26, %s38
      %s196 = ssub.s32 %s27, %s34
      %s197 = sor.u32 %s195, %s196
      %p198 = scmp.eq.s32.totalorder %s197, 0
      %s200 = sadd.s32 %s199, 1
      %s201 = scalar_select %p198, %s199, %s200
      %p204 = pneg %p198
      %p205 = scmp.eq.s32.totalorder %s19, 3
      %p206 = por %p204, %p205
      %p207 = scmp.ne.s32.totalorder %s199, %s202
      %p208 = scmp.eq.s32.totalorder %s19, 0
      %p209 = por %p207, %p208
      %p210 = scmp.ne.s32.totalorder %s199, %s202
      %p211 = scmp.eq.s32.totalorder %s24, 3
      %p212 = por %p210, %p211
      %p213 = scmp.ne.s32.totalorder %s202, %s203
      %p214 = scmp.eq.s32.totalorder %s24, 0
      %p215 = por %p213, %p214
      %p216 = scmp.ne.s32.totalorder %s202, %s203
      %p217 = scmp.eq.s32.totalorder %s25, 3
      %p218 = por %p216, %p217
      %p220 = scmp.ne.s32.totalorder %s203, %s219
      %p221 = scmp.eq.s32.totalorder %s25, 0
      %p222 = por %p220, %p221
      %p223 = scmp.le.s32.totalorder 1, %s19
      %p224 = scmp.lt.s32.totalorder %s19, 5
      %p225 = pnand %p223, %p224
      %p226 = pneg %p225
      // Predicated region
      $region9: #{tpu_custom_call.1} parent=5 // pred_check
        _
      $region10: #{tpu_custom_call.1} parent=5 // pred_check_branch
        %228 = sbr.rel (%p225) target = $region12
      $region11: #{tpu_custom_call.1} parent=5 // pred_region
        %s229 = ssub.s32 %s19, 1
      $region12: #{tpu_custom_call.1} parent=5 // pred_fallthru
        _
      %p230 = scmp.lt.s32.totalorder %s19, 4
      // Predicated region
      $region13: #{tpu_custom_call.1} parent=5 // pred_check
        %p231 = pneg %p230
      $region14: #{tpu_custom_call.1} parent=5 // pred_check_branch
        %233 = sbr.rel (%p231) target = $region16
      $region15: #{tpu_custom_call.1} parent=5 // pred_region
        // Predicated region
        $region17: #{tpu_custom_call.1} parent=15 // pred_check
          %p234 = pneg %p53
        $region18: #{tpu_custom_call.1} parent=15 // pred_check_branch
          %236 = sbr.rel (%p234) target = $region20
        $region19: #{tpu_custom_call.1} parent=15 // pred_region
          %s237 = sand.u32 %s43, 1
          %s238 = scalar_lea.sflag [#allocation3], %s237
          %s239 = sand.u32 %s43, 1
          %s240 = smul.addr %s239, 32
          %s241 = scalar_lea.vmem [#allocation2], %s240
          %s242 = smul.u32 4, %s27
          %s244 = ssub.s32 512, 512
          %245 = vsyncadd %s238, %s244
          %s246 = smul.addr %s26, 4
          %s247 = sadd.s32 %s242, %s246
          %s248 = smul.addr %s247, 128
          %s249 = scalar_lea.hbm %s0, %s248
          %s251 = sshll.u32 %s241, 4
          %s252 = int_to_ptr.vmem [resolvable:$true] %s251
          %254 = dma.hbm_to_vmem [thread:$0]  %s249, 512, %s252, %s238
        $region20: #{tpu_custom_call.1} parent=15 // pred_fallthru
          _
        // Predicated region
        $region21: #{tpu_custom_call.1} parent=15 // pred_check
          %p255 = pneg %p81
        $region22: #{tpu_custom_call.1} parent=15 // pred_check_branch
          %257 = sbr.rel (%p255) target = $region24
        $region23: #{tpu_custom_call.1} parent=15 // pred_region
          %s258 = sand.u32 %s71, 1
          %s259 = scalar_lea.sflag [#allocation6], %s258
          %s260 = sand.u32 %s71, 1
          %s261 = smul.addr %s260, 32
          %s262 = scalar_lea.vmem [#allocation5], %s261
          %s263 = smul.u32 4, %s27
          %s265 = ssub.s32 512, 512
          %266 = vsyncadd %s259, %s265
          %s267 = smul.addr %s26, 4
          %s268 = sadd.s32 %s263, %s267
          %s269 = smul.addr %s268, 128
          %s270 = scalar_lea.hbm %s1, %s269
          %s272 = sshll.u32 %s262, 4
          %s273 = int_to_ptr.vmem [resolvable:$true] %s272
          %275 = dma.hbm_to_vmem [thread:$0]  %s270, 512, %s273, %s259
        $region24: #{tpu_custom_call.1} parent=15 // pred_fallthru
          _
        // Predicated region
        $region25: #{tpu_custom_call.1} parent=15 // pred_check
          %p276 = pneg %p131
        $region26: #{tpu_custom_call.1} parent=15 // pred_check_branch
          %278 = sbr.rel (%p276) target = $region28
        $region27: #{tpu_custom_call.1} parent=15 // pred_region
          %p279 = scmp.lt.s32.totalorder %s26, 0
          %s280 = ssub.s32 0, %s26
          %s281 = scalar_select %p279, %s280, %s26
          %s282 = sand.u32 %s281, 1
          %s283 = ssub.s32 0, %s282
          %s284 = scalar_select %p279, %s283, %s282
          %p285 = scmp.ne.s32.totalorder %s284, 0
          %p286 = scmp.lt.s32.totalorder %s284, 0
          %p287 = pnand %p286, %p285
          %p288 = pneg %p287
          %s289 = sadd.s32 %s284, 2
          %s290 = scalar_select %p288, %s289, %s284
          %p291 = scmp.lt.s32.totalorder %s290, 1
          %s292 = scalar_select %p291, %s290, 1
          %s293 = scalar_lea.vmem %s2, %s292
          %p294 = scmp.lt.s32.totalorder %s26, 0
          %s295 = ssub.s32 0, %s26
          %s296 = scalar_select %p294, %s295, %s26
          %s297 = sand.u32 %s296, 1
          %s298 = ssub.s32 0, %s297
          %s299 = scalar_select %p294, %s298, %s297
          %p300 = scmp.ne.s32.totalorder %s299, 0
          %p301 = scmp.lt.s32.totalorder %s299, 0
          %p302 = pnand %p301, %p300
          %p303 = pneg %p302
          %s304 = sadd.s32 %s299, 2
          %s305 = scalar_select %p303, %s304, %s299
        $region28: #{tpu_custom_call.1} parent=15 // pred_fallthru
          _
        // Predicated region
        $region29: #{tpu_custom_call.1} parent=15 // pred_check
          %p306 = pneg %p181
        $region30: #{tpu_custom_call.1} parent=15 // pred_check_branch
          %308 = sbr.rel (%p306) target = $region32
        $region31: #{tpu_custom_call.1} parent=15 // pred_region
          %p309 = scmp.lt.s32.totalorder %s26, 0
          %s310 = ssub.s32 0, %s26
          %s311 = scalar_select %p309, %s310, %s26
          %s312 = sand.u32 %s311, 1
          %s313 = ssub.s32 0, %s312
          %s314 = scalar_select %p309, %s313, %s312
          %p315 = scmp.ne.s32.totalorder %s314, 0
          %p316 = scmp.lt.s32.totalorder %s314, 0
          %p317 = pnand %p316, %p315
          %p318 = pneg %p317
          %s319 = sadd.s32 %s314, 2
          %s320 = scalar_select %p318, %s319, %s314
          %p321 = scmp.lt.s32.totalorder %s320, 1
          %s322 = scalar_select %p321, %s320, 1
          %s323 = scalar_lea.vmem %s3, %s322
          %p324 = scmp.lt.s32.totalorder %s26, 0
          %s325 = ssub.s32 0, %s26
          %s326 = scalar_select %p324, %s325, %s26
          %s327 = sand.u32 %s326, 1
          %s328 = ssub.s32 0, %s327
          %s329 = scalar_select %p324, %s328, %s327
          %p330 = scmp.ne.s32.totalorder %s329, 0
          %p331 = scmp.lt.s32.totalorder %s329, 0
          %p332 = pnand %p331, %p330
          %p333 = pneg %p332
          %s334 = sadd.s32 %s329, 2
          %s335 = scalar_select %p333, %s334, %s329
        $region32: #{tpu_custom_call.1} parent=15 // pred_fallthru
          _
      $region16: #{tpu_custom_call.1} parent=5 // pred_fallthru
        _
      %p336 = scmp.le.s32.totalorder 1, %s19
      %p337 = scmp.lt.s32.totalorder %s19, 5
      %p338 = pnand %p336, %p337
      %p339 = pneg %p338
      // Predicated region
      $region33: #{tpu_custom_call.1} parent=5 // pred_check
        _
      $region34: #{tpu_custom_call.1} parent=5 // pred_check_branch
        %341 = sbr.rel (%p338) target = $region36
      $region35: #{tpu_custom_call.1} parent=5 // pred_region
        %s342 = ssub.s32 %s19, 1
        %s343 = sand.u32 %s46, 1
        %s344 = scalar_lea.sflag [#allocation3], %s343
        %s345 = sand.u32 %s46, 1
        %s346 = smul.addr %s345, 32
        %s347 = scalar_lea.vmem [#allocation2], %s346
        // Predicated region
        $region37: #{tpu_custom_call.1} parent=35 // pred_check
          %p348 = pneg %p59
        $region38: #{tpu_custom_call.1} parent=35 // pred_check_branch
          %350 = sbr.rel (%p348) target = $region40
        $region39: #{tpu_custom_call.1} parent=35 // pred_region
          %351 = dma.done %s344, 512
        $region40: #{tpu_custom_call.1} parent=35 // pred_fallthru
          _
        %s352 = sand.u32 %s74, 1
        %s353 = scalar_lea.sflag [#allocation6], %s352
        %s354 = sand.u32 %s74, 1
        %s355 = smul.addr %s354, 32
        %s356 = scalar_lea.vmem [#allocation5], %s355
        // Predicated region
        $region41: #{tpu_custom_call.1} parent=35 // pred_check
          %p357 = pneg %p87
        $region42: #{tpu_custom_call.1} parent=35 // pred_check_branch
          %359 = sbr.rel (%p357) target = $region44
        $region43: #{tpu_custom_call.1} parent=35 // pred_region
          %360 = dma.done %s353, 512
        $region44: #{tpu_custom_call.1} parent=35 // pred_fallthru
          _
        %s361 = sand.u32 %s46, 1
        %s362 = scalar_lea.sflag [#allocation3], %s361
        %s363 = sand.u32 %s46, 1
        %s364 = smul.addr %s363, 32
        %s365 = scalar_lea.vmem [#allocation2], %s364
        %p366 = pneg %p59
        %p367 = pneg %p56
        %s368 = sand.u32 %s74, 1
        %s369 = scalar_lea.sflag [#allocation6], %s368
        %s370 = sand.u32 %s74, 1
        %s371 = smul.addr %s370, 32
        %s372 = scalar_lea.vmem [#allocation5], %s371
        %p373 = pneg %p87
        %p374 = pneg %p84
        %p375 = scmp.lt.s32.totalorder %s28, 0
        %s376 = ssub.s32 0, %s28
        %s377 = scalar_select %p375, %s376, %s28
        %s378 = sand.u32 %s377, 1
        %s379 = ssub.s32 0, %s378
        %s380 = scalar_select %p375, %s379, %s378
        %p381 = scmp.ne.s32.totalorder %s380, 0
        %p382 = scmp.lt.s32.totalorder %s380, 0
        %p383 = pnand %p382, %p381
        %p384 = pneg %p383
        %s385 = sadd.s32 %s380, 2
        %s386 = scalar_select %p384, %s385, %s380
        %p387 = scmp.lt.s32.totalorder %s386, 1
        %s388 = scalar_select %p387, %s386, 1
        %s389 = scalar_lea.vmem %s2, %s388
        %p390 = pneg %p137
        %p391 = pneg %p134
        %p392 = scmp.lt.s32.totalorder %s28, 0
        %s393 = ssub.s32 0, %s28
        %s394 = scalar_select %p392, %s393, %s28
        %s395 = sand.u32 %s394, 1
        %s396 = ssub.s32 0, %s395
        %s397 = scalar_select %p392, %s396, %s395
        %p398 = scmp.ne.s32.totalorder %s397, 0
        %p399 = scmp.lt.s32.totalorder %s397, 0
        %p400 = pnand %p399, %p398
        %p401 = pneg %p400
        %s402 = sadd.s32 %s397, 2
        %s403 = scalar_select %p401, %s402, %s397
        %p404 = scmp.lt.s32.totalorder %s403, 1
        %s405 = scalar_select %p404, %s403, 1
        %s406 = scalar_lea.vmem %s3, %s405
        %p407 = pneg %p187
        %p408 = pneg %p184
        %p409 = pneg %p215
        %p410 = pneg %p212
        %s411 = sand.u32 %s202, 1
        %s412 = scalar_lea.sflag [#allocation4], %s411
        %s413 = sand.u32 %s202, 1
        %s414 = smul.addr %s413, 4
        %s415 = scalar_lea.vmem [#allocation7], %s414
        %s416 = smul.u32 4, %s29
        %s417 = smul.u32 4, %s29
        %p418 = scmp.lt.s32.totalorder %s28, 0
        %s419 = ssub.s32 0, %s28
        %s420 = scalar_select %p418, %s419, %s28
        %s421 = sand.u32 %s420, 1
        %s422 = ssub.s32 0, %s421
        %s423 = scalar_select %p418, %s422, %s421
        %p424 = scmp.ne.s32.totalorder %s423, 0
        %p425 = scmp.lt.s32.totalorder %s423, 0
        %p426 = pnand %p425, %p424
        %p427 = pneg %p426
        %s428 = sadd.s32 %s423, 2
        %s429 = scalar_select %p427, %s428, %s423
        %p430 = scmp.lt.s32.totalorder %s429, 1
        %s431 = scalar_select %p430, %s429, 1
        %s432 = scalar_lea.vmem %s2, %s431
        %p433 = scmp.lt.s32.totalorder %s28, 0
        %s434 = ssub.s32 0, %s28
        %s435 = scalar_select %p433, %s434, %s28
        %s436 = sand.u32 %s435, 1
        %s437 = ssub.s32 0, %s436
        %s438 = scalar_select %p433, %s437, %s436
        %p439 = scmp.ne.s32.totalorder %s438, 0
        %p440 = scmp.lt.s32.totalorder %s438, 0
        %p441 = pnand %p440, %p439
        %p442 = pneg %p441
        %s443 = sadd.s32 %s438, 2
        %s444 = scalar_select %p442, %s443, %s438
        %p445 = scmp.lt.s32.totalorder %s28, 0
        %s446 = ssub.s32 0, %s28
        %s447 = scalar_select %p445, %s446, %s28
        %s448 = sand.u32 %s447, 1
        %s449 = ssub.s32 0, %s448
        %s450 = scalar_select %p445, %s449, %s448
        %p451 = scmp.ne.s32.totalorder %s450, 0
        %p452 = scmp.lt.s32.totalorder %s450, 0
        %p453 = pnand %p452, %p451
        %p454 = pneg %p453
        %s455 = sadd.s32 %s450, 2
        %s456 = scalar_select %p454, %s455, %s450
        %p457 = scmp.lt.s32.totalorder %s456, 1
        %s458 = scalar_select %p457, %s456, 1
        %s459 = scalar_lea.vmem %s3, %s458
        %p460 = scmp.lt.s32.totalorder %s28, 0
        %s461 = ssub.s32 0, %s28
        %s462 = scalar_select %p460, %s461, %s28
        %s463 = sand.u32 %s462, 1
        %s464 = ssub.s32 0, %s463
        %s465 = scalar_select %p460, %s464, %s463
        %p466 = scmp.ne.s32.totalorder %s465, 0
        %p467 = scmp.lt.s32.totalorder %s465, 0
        %p468 = pnand %p467, %p466
        %p469 = pneg %p468
        %s470 = sadd.s32 %s465, 2
        %s471 = scalar_select %p469, %s470, %s465
        %s472 = smul.u32 4, %s29
        %v473 = vld [vmem:[%s347] sm:$0xff]
        %v474 = vld [vmem:[%s347 + $0x8] sm:$0xff]
        %v475 = vld [vmem:[%s347 + $0x10] sm:$0xff]
        %v476 = vld [vmem:[%s347 + $0x18] sm:$0xff]
        %v477 = vld [vmem:[%s356] sm:$0xff]
        %v478 = vld [vmem:[%s356 + $0x8] sm:$0xff]
        %v479 = vld [vmem:[%s356 + $0x10] sm:$0xff]
        %v480 = vld [vmem:[%s356 + $0x18] sm:$0xff]
        %v481 = vadd.f32 %v473, %v477
        %v482 = vadd.f32 %v474, %v478
        %v483 = vadd.f32 %v475, %v479
        %v484 = vadd.f32 %v476, %v480
        %v485 = vmax.f32 %v481, 0.0
        %v486 = vmax.f32 %v482, 0.0
        %v487 = vmax.f32 %v483, 0.0
        %v488 = vmax.f32 %v484, 0.0
        %v489 = vld [vmem:[%s432] sm:$0x1]
        %v490 = vld [vmem:[%s459] sm:$0x1]
        %492 = vset.pattern.permute.xlu0 0
        %493 = vperm.xlu0 %492, %v490
        %v494 = vpop.permute.xlu0 %493
        %v496 = vlaneseq
        %v497 = vshrl.u32 %v496, 7
        %v498 = vsub.s32 0, %v497
        %v499 = vrot.slane %v494, %v498
        %vm500 = vcmask 64512
        %v502 = vsel %vm500, %v489, 0
        %v504 = vand.u32 %v486, 4294901760
        %505 = vmatprep.subr.mxu0 %v504
        %v506 = vand.u32 %v485, 4294901760
        %507 = vmatpush1.msra.mxu0 %v506
        %508 = vmatprep.subr.mxu0 0.0
        %509 = vmatpush1.msra.mxu0 0.0
        %510 = vmatprep.subr.mxu0 0.0
        %511 = vmatpush1.msra.mxu0 0.0
        %512 = vmatprep.subr.mxu0 0.0
        %513 = vmatpush1.msra.mxu0 0.0
        %514 = vmatprep.subr.mxu0 0.0
        %515 = vmatpush1.msra.mxu0 0.0
        %516 = vmatprep.subr.mxu0 0.0
        %517 = vmatpush1.msra.mxu0 0.0
        %518 = vmatprep.subr.mxu0 0.0
        %519 = vmatpush1.msra.mxu0 0.0
        %520 = vmatprep.subr.mxu0 0.0
        %521 = vmatpush1.msra.mxu0 0.0
        %522 = vmatprep.subr.mxu0 0.0
        %523 = vmatpush1.msra.mxu0 0.0
        %524 = vmatprep.subr.mxu0 0.0
        %525 = vmatpush1.msra.mxu0 0.0
        %526 = vmatprep.subr.mxu0 0.0
        %527 = vmatpush1.msra.mxu0 0.0
        %528 = vmatprep.subr.mxu0 0.0
        %529 = vmatpush1.msra.mxu0 0.0
        %530 = vmatprep.subr.mxu0 0.0
        %531 = vmatpush1.msra.mxu0 0.0
        %532 = vmatprep.subr.mxu0 0.0
        %533 = vmatpush1.msra.mxu0 0.0
        %534 = vmatprep.subr.mxu0 0.0
        %535 = vmatpush1.msra.mxu0 0.0
        %536 = vmatprep.subr.mxu0 0.0
        %537 = vmatpush1.msra.mxu0 0.0
        %538 = vmatprep.subr.mxu0 0.0
        %539 = vmatpush1.msra.mxu0 0.0
        %540 = vmatprep.subr.mxu0 0.0
        %541 = vmatpush1.msra.mxu0 0.0
        %542 = vmatprep.subr.mxu0 0.0
        %543 = vmatpush1.msra.mxu0 0.0
        %544 = vmatprep.subr.mxu0 0.0
        %545 = vmatpush1.msra.mxu0 0.0
        %546 = vmatprep.subr.mxu0 0.0
        %547 = vmatpush1.msra.mxu0 0.0
        %548 = vmatprep.subr.mxu0 0.0
        %549 = vmatpush1.msra.mxu0 0.0
        %550 = vmatprep.subr.mxu0 0.0
        %551 = vmatpush1.msra.mxu0 0.0
        %552 = vmatprep.subr.mxu0 0.0
        %553 = vmatpush1.msra.mxu0 0.0
        %554 = vmatprep.subr.mxu0 0.0
        %555 = vmatpush1.msra.mxu0 0.0
        %556 = vmatprep.subr.mxu0 0.0
        %557 = vmatpush1.msra.mxu0 0.0
        %558 = vmatprep.subr.mxu0 0.0
        %559 = vmatpush1.msra.mxu0 0.0
        %560 = vmatprep.subr.mxu0 0.0
        %561 = vmatpush1.msra.mxu0 0.0
        %562 = vmatprep.subr.mxu0 0.0
        %563 = vmatpush1.msra.mxu0 0.0
        %564 = vmatprep.subr.mxu0 0.0
        %565 = vmatpush1.msra.mxu0 0.0
        %566 = vmatprep.subr.mxu0 0.0
        %567 = vmatpush1.msra.mxu0 0.0
        %568 = vmatprep.subr.mxu0 0.0
        %569 = vmatpush1.msra.mxu0 0.0
        %570 = vmatprep.mubr.f32.mxu0 0.0
        %v571 = vand.u32 %v502, 4294901760
        %v572 = vsub.f32 %v502, %v571
        %v573 = vand.u32 %v572, 4294901760
        %v574 = vsub.f32 %v572, %v573
        %v575 = vand.u32 %v574, 4294901760
        %576 = vmatmul.mubr.f32.gmra.mrb[0].mxu0 %v575
        %v577 = vpop.f32.mrb[0].mxu0
        %v578 = vadd.f32 %v499, %v577
        %v579 = vpop.f32.mrb[0].mxu0
        %v580 = vadd.f32 %v499, %v579
        %581 = vdwg.mxu0
        %v582 = vand.u32 %v486, 4294901760
        %v583 = vsub.f32 %v486, %v582
        %v584 = vand.u32 %v583, 4294901760
        %v585 = vsub.f32 %v583, %v584
        %v586 = vand.u32 %v585, 4294901760
        %587 = vmatprep.subr.mxu0 %v586
        %v588 = vand.u32 %v485, 4294901760
        %v589 = vsub.f32 %v485, %v588
        %v590 = vand.u32 %v589, 4294901760
        %v591 = vsub.f32 %v589, %v590
        %v592 = vand.u32 %v591, 4294901760
        %593 = vmatpush1.msra.mxu0 %v592
        %594 = vmatprep.subr.mxu0 0.0
        %595 = vmatpush1.msra.mxu0 0.0
        %596 = vmatprep.subr.mxu0 0.0
        %597 = vmatpush1.msra.mxu0 0.0
        %598 = vmatprep.subr.mxu0 0.0
        %599 = vmatpush1.msra.mxu0 0.0
        %600 = vmatprep.subr.mxu0 0.0
        %601 = vmatpush1.msra.mxu0 0.0
        %602 = vmatprep.subr.mxu0 0.0
        %603 = vmatpush1.msra.mxu0 0.0
        %604 = vmatprep.subr.mxu0 0.0
        %605 = vmatpush1.msra.mxu0 0.0
        %606 = vmatprep.subr.mxu0 0.0
        %607 = vmatpush1.msra.mxu0 0.0
        %608 = vmatprep.subr.mxu0 0.0
        %609 = vmatpush1.msra.mxu0 0.0
        %610 = vmatprep.subr.mxu0 0.0
        %611 = vmatpush1.msra.mxu0 0.0
        %612 = vmatprep.subr.mxu0 0.0
        %613 = vmatpush1.msra.mxu0 0.0
        %614 = vmatprep.subr.mxu0 0.0
        %615 = vmatpush1.msra.mxu0 0.0
        %616 = vmatprep.subr.mxu0 0.0
        %617 = vmatpush1.msra.mxu0 0.0
        %618 = vmatprep.subr.mxu0 0.0
        %619 = vmatpush1.msra.mxu0 0.0
        %620 = vmatprep.subr.mxu0 0.0
        %621 = vmatpush1.msra.mxu0 0.0
        %622 = vmatprep.subr.mxu0 0.0
        %623 = vmatpush1.msra.mxu0 0.0
        %624 = vmatprep.subr.mxu0 0.0
        %625 = vmatpush1.msra.mxu0 0.0
        %626 = vmatprep.subr.mxu0 0.0
        %627 = vmatpush1.msra.mxu0 0.0
        %628 = vmatprep.subr.mxu0 0.0
        %629 = vmatpush1.msra.mxu0 0.0
        %630 = vmatprep.subr.mxu0 0.0
        %631 = vmatpush1.msra.mxu0 0.0
        %632 = vmatprep.subr.mxu0 0.0
        %633 = vmatpush1.msra.mxu0 0.0
        %634 = vmatprep.subr.mxu0 0.0
        %635 = vmatpush1.msra.mxu0 0.0
        %636 = vmatprep.subr.mxu0 0.0
        %637 = vmatpush1.msra.mxu0 0.0
        %638 = vmatprep.subr.mxu0 0.0
        %639 = vmatpush1.msra.mxu0 0.0
        %640 = vmatprep.subr.mxu0 0.0
        %641 = vmatpush1.msra.mxu0 0.0
        %642 = vmatprep.subr.mxu0 0.0
        %643 = vmatpush1.msra.mxu0 0.0
        %644 = vmatprep.subr.mxu0 0.0
        %645 = vmatpush1.msra.mxu0 0.0
        %646 = vmatprep.subr.mxu0 0.0
        %647 = vmatpush1.msra.mxu0 0.0
        %648 = vmatprep.subr.mxu0 0.0
        %649 = vmatpush1.msra.mxu0 0.0
        %650 = vmatprep.subr.mxu0 0.0
        %651 = vmatpush1.msra.mxu0 0.0
        %652 = vmatprep.subr.mxu0 0.0
        %653 = vmatpush1.msra.mxu0 0.0
        %654 = vmatprep.subr.mxu0 0.0
        %655 = vmatpush1.msra.mxu0 0.0
        %656 = vmatprep.mubr.f32.mxu0 0.0
        %v657 = vand.u32 %v502, 4294901760
        %658 = vmatmul.mubr.f32.gmra.mrb[0].mxu0 %v657
        %v659 = vpop.f32.mrb[0].mxu0
        %v660 = vadd.f32 %v578, %v659
        %v661 = vpop.f32.mrb[0].mxu0
        %v662 = vadd.f32 %v580, %v661
        %663 = vdwg.mxu0
        %v664 = vand.u32 %v486, 4294901760
        %v665 = vsub.f32 %v486, %v664
        %666 = vmatprep.subr.mxu0 %v665
        %v667 = vand.u32 %v485, 4294901760
        %v668 = vsub.f32 %v485, %v667
        %669 = vmatpush1.msra.mxu0 %v668
        %670 = vmatprep.subr.mxu0 0.0
        %671 = vmatpush1.msra.mxu0 0.0
        %672 = vmatprep.subr.mxu0 0.0
        %673 = vmatpush1.msra.mxu0 0.0
        %674 = vmatprep.subr.mxu0 0.0
        %675 = vmatpush1.msra.mxu0 0.0
        %676 = vmatprep.subr.mxu0 0.0
        %677 = vmatpush1.msra.mxu0 0.0
        %678 = vmatprep.subr.mxu0 0.0
        %679 = vmatpush1.msra.mxu0 0.0
        %680 = vmatprep.subr.mxu0 0.0
        %681 = vmatpush1.msra.mxu0 0.0
        %682 = vmatprep.subr.mxu0 0.0
        %683 = vmatpush1.msra.mxu0 0.0
        %684 = vmatprep.subr.mxu0 0.0
        %685 = vmatpush1.msra.mxu0 0.0
        %686 = vmatprep.subr.mxu0 0.0
        %687 = vmatpush1.msra.mxu0 0.0
        %688 = vmatprep.subr.mxu0 0.0
        %689 = vmatpush1.msra.mxu0 0.0
        %690 = vmatprep.subr.mxu0 0.0
        %691 = vmatpush1.msra.mxu0 0.0
        %692 = vmatprep.subr.mxu0 0.0
        %693 = vmatpush1.msra.mxu0 0.0
        %694 = vmatprep.subr.mxu0 0.0
        %695 = vmatpush1.msra.mxu0 0.0
        %696 = vmatprep.subr.mxu0 0.0
        %697 = vmatpush1.msra.mxu0 0.0
        %698 = vmatprep.subr.mxu0 0.0
        %699 = vmatpush1.msra.mxu0 0.0
        %700 = vmatprep.subr.mxu0 0.0
        %701 = vmatpush1.msra.mxu0 0.0
        %702 = vmatprep.subr.mxu0 0.0
        %703 = vmatpush1.msra.mxu0 0.0
        %704 = vmatprep.subr.mxu0 0.0
        %705 = vmatpush1.msra.mxu0 0.0
        %706 = vmatprep.subr.mxu0 0.0
        %707 = vmatpush1.msra.mxu0 0.0
        %708 = vmatprep.subr.mxu0 0.0
        %709 = vmatpush1.msra.mxu0 0.0
        %710 = vmatprep.subr.mxu0 0.0
        %711 = vmatpush1.msra.mxu0 0.0
        %712 = vmatprep.subr.mxu0 0.0
        %713 = vmatpush1.msra.mxu0 0.0
        %714 = vmatprep.subr.mxu0 0.0
        %715 = vmatpush1.msra.mxu0 0.0
        %716 = vmatprep.subr.mxu0 0.0
        %717 = vmatpush1.msra.mxu0 0.0
        %718 = vmatprep.subr.mxu0 0.0
        %719 = vmatpush1.msra.mxu0 0.0
        %720 = vmatprep.subr.mxu0 0.0
        %721 = vmatpush1.msra.mxu0 0.0
        %722 = vmatprep.subr.mxu0 0.0
        %723 = vmatpush1.msra.mxu0 0.0
        %724 = vmatprep.subr.mxu0 0.0
        %725 = vmatpush1.msra.mxu0 0.0
        %726 = vmatprep.subr.mxu0 0.0
        %727 = vmatpush1.msra.mxu0 0.0
        %728 = vmatprep.subr.mxu0 0.0
        %729 = vmatpush1.msra.mxu0 0.0
        %730 = vmatprep.subr.mxu0 0.0
        %731 = vmatpush1.msra.mxu0 0.0
        %732 = vmatprep.mubr.f32.mxu0 0.0
        %v733 = vand.u32 %v502, 4294901760
        %v734 = vsub.f32 %v502, %v733
        %735 = vmatmul.mubr.f32.gmra.mrb[0].mxu0 %v734
        %v736 = vpop.f32.mrb[0].mxu0
        %v737 = vadd.f32 %v660, %v736
        %v738 = vpop.f32.mrb[0].mxu0
        %v739 = vadd.f32 %v662, %v738
        %740 = vdwg.mxu0
        %v741 = vand.u32 %v486, 4294901760
        %742 = vmatprep.subr.mxu0 %v741
        %v743 = vand.u32 %v485, 4294901760
        %744 = vmatpush1.msra.mxu0 %v743
        %745 = vmatprep.subr.mxu0 0.0
        %746 = vmatpush1.msra.mxu0 0.0
        %747 = vmatprep.subr.mxu0 0.0
        %748 = vmatpush1.msra.mxu0 0.0
        %749 = vmatprep.subr.mxu0 0.0
        %750 = vmatpush1.msra.mxu0 0.0
        %751 = vmatprep.subr.mxu0 0.0
        %752 = vmatpush1.msra.mxu0 0.0
        %753 = vmatprep.subr.mxu0 0.0
        %754 = vmatpush1.msra.mxu0 0.0
        %755 = vmatprep.subr.mxu0 0.0
        %756 = vmatpush1.msra.mxu0 0.0
        %757 = vmatprep.subr.mxu0 0.0
        %758 = vmatpush1.msra.mxu0 0.0
        %759 = vmatprep.subr.mxu0 0.0
        %760 = vmatpush1.msra.mxu0 0.0
        %761 = vmatprep.subr.mxu0 0.0
        %762 = vmatpush1.msra.mxu0 0.0
        %763 = vmatprep.subr.mxu0 0.0
        %764 = vmatpush1.msra.mxu0 0.0
        %765 = vmatprep.subr.mxu0 0.0
        %766 = vmatpush1.msra.mxu0 0.0
        %767 = vmatprep.subr.mxu0 0.0
        %768 = vmatpush1.msra.mxu0 0.0
        %769 = vmatprep.subr.mxu0 0.0
        %770 = vmatpush1.msra.mxu0 0.0
        %771 = vmatprep.subr.mxu0 0.0
        %772 = vmatpush1.msra.mxu0 0.0
        %773 = vmatprep.subr.mxu0 0.0
        %774 = vmatpush1.msra.mxu0 0.0
        %775 = vmatprep.subr.mxu0 0.0
        %776 = vmatpush1.msra.mxu0 0.0
        %777 = vmatprep.subr.mxu0 0.0
        %778 = vmatpush1.msra.mxu0 0.0
        %779 = vmatprep.subr.mxu0 0.0
        %780 = vmatpush1.msra.mxu0 0.0
        %781 = vmatprep.subr.mxu0 0.0
        %782 = vmatpush1.msra.mxu0 0.0
        %783 = vmatprep.subr.mxu0 0.0
        %784 = vmatpush1.msra.mxu0 0.0
        %785 = vmatprep.subr.mxu0 0.0
        %786 = vmatpush1.msra.mxu0 0.0
        %787 = vmatprep.subr.mxu0 0.0
        %788 = vmatpush1.msra.mxu0 0.0
        %789 = vmatprep.subr.mxu0 0.0
        %790 = vmatpush1.msra.mxu0 0.0
        %791 = vmatprep.subr.mxu0 0.0
        %792 = vmatpush1.msra.mxu0 0.0
        %793 = vmatprep.subr.mxu0 0.0
        %794 = vmatpush1.msra.mxu0 0.0
        %795 = vmatprep.subr.mxu0 0.0
        %796 = vmatpush1.msra.mxu0 0.0
        %797 = vmatprep.subr.mxu0 0.0
        %798 = vmatpush1.msra.mxu0 0.0
        %799 = vmatprep.subr.mxu0 0.0
        %800 = vmatpush1.msra.mxu0 0.0
        %801 = vmatprep.subr.mxu0 0.0
        %802 = vmatpush1.msra.mxu0 0.0
        %803 = vmatprep.subr.mxu0 0.0
        %804 = vmatpush1.msra.mxu0 0.0
        %805 = vmatprep.subr.mxu0 0.0
        %806 = vmatpush1.msra.mxu0 0.0
        %807 = vmatprep.mubr.f32.mxu0 0.0
        %v808 = vand.u32 %v502, 4294901760
        %v809 = vsub.f32 %v502, %v808
        %v810 = vand.u32 %v809, 4294901760
        %811 = vmatmul.mubr.f32.gmra.mrb[0].mxu0 %v810
        %v812 = vpop.f32.mrb[0].mxu0
        %v813 = vadd.f32 %v737, %v812
        %v814 = vpop.f32.mrb[0].mxu0
        %v815 = vadd.f32 %v739, %v814
        %816 = vdwg.mxu0
        %v817 = vand.u32 %v486, 4294901760
        %v818 = vsub.f32 %v486, %v817
        %v819 = vand.u32 %v818, 4294901760
        %820 = vmatprep.subr.mxu0 %v819
        %v821 = vand.u32 %v485, 4294901760
        %v822 = vsub.f32 %v485, %v821
        %v823 = vand.u32 %v822, 4294901760
        %824 = vmatpush1.msra.mxu0 %v823
        %825 = vmatprep.subr.mxu0 0.0
        %826 = vmatpush1.msra.mxu0 0.0
        %827 = vmatprep.subr.mxu0 0.0
        %828 = vmatpush1.msra.mxu0 0.0
        %829 = vmatprep.subr.mxu0 0.0
        %830 = vmatpush1.msra.mxu0 0.0
        %831 = vmatprep.subr.mxu0 0.0
        %832 = vmatpush1.msra.mxu0 0.0
        %833 = vmatprep.subr.mxu0 0.0
        %834 = vmatpush1.msra.mxu0 0.0
        %835 = vmatprep.subr.mxu0 0.0
        %836 = vmatpush1.msra.mxu0 0.0
        %837 = vmatprep.subr.mxu0 0.0
        %838 = vmatpush1.msra.mxu0 0.0
        %839 = vmatprep.subr.mxu0 0.0
        %840 = vmatpush1.msra.mxu0 0.0
        %841 = vmatprep.subr.mxu0 0.0
        %842 = vmatpush1.msra.mxu0 0.0
        %843 = vmatprep.subr.mxu0 0.0
        %844 = vmatpush1.msra.mxu0 0.0
        %845 = vmatprep.subr.mxu0 0.0
        %846 = vmatpush1.msra.mxu0 0.0
        %847 = vmatprep.subr.mxu0 0.0
        %848 = vmatpush1.msra.mxu0 0.0
        %849 = vmatprep.subr.mxu0 0.0
        %850 = vmatpush1.msra.mxu0 0.0
        %851 = vmatprep.subr.mxu0 0.0
        %852 = vmatpush1.msra.mxu0 0.0
        %853 = vmatprep.subr.mxu0 0.0
        %854 = vmatpush1.msra.mxu0 0.0
        %855 = vmatprep.subr.mxu0 0.0
        %856 = vmatpush1.msra.mxu0 0.0
        %857 = vmatprep.subr.mxu0 0.0
        %858 = vmatpush1.msra.mxu0 0.0
        %859 = vmatprep.subr.mxu0 0.0
        %860 = vmatpush1.msra.mxu0 0.0
        %861 = vmatprep.subr.mxu0 0.0
        %862 = vmatpush1.msra.mxu0 0.0
        %863 = vmatprep.subr.mxu0 0.0
        %864 = vmatpush1.msra.mxu0 0.0
        %865 = vmatprep.subr.mxu0 0.0
        %866 = vmatpush1.msra.mxu0 0.0
        %867 = vmatprep.subr.mxu0 0.0
        %868 = vmatpush1.msra.mxu0 0.0
        %869 = vmatprep.subr.mxu0 0.0
        %870 = vmatpush1.msra.mxu0 0.0
        %871 = vmatprep.subr.mxu0 0.0
        %872 = vmatpush1.msra.mxu0 0.0
        %873 = vmatprep.subr.mxu0 0.0
        %874 = vmatpush1.msra.mxu0 0.0
        %875 = vmatprep.subr.mxu0 0.0
        %876 = vmatpush1.msra.mxu0 0.0
        %877 = vmatprep.subr.mxu0 0.0
        %878 = vmatpush1.msra.mxu0 0.0
        %879 = vmatprep.subr.mxu0 0.0
        %880 = vmatpush1.msra.mxu0 0.0
        %881 = vmatprep.subr.mxu0 0.0
        %882 = vmatpush1.msra.mxu0 0.0
        %883 = vmatprep.subr.mxu0 0.0
        %884 = vmatpush1.msra.mxu0 0.0
        %885 = vmatprep.subr.mxu0 0.0
        %886 = vmatpush1.msra.mxu0 0.0
        %887 = vmatprep.mubr.f32.mxu0 0.0
        %v888 = vand.u32 %v502, 4294901760
        %889 = vmatmul.mubr.f32.gmra.mrb[0].mxu0 %v888
        %v890 = vpop.f32.mrb[0].mxu0
        %v891 = vadd.f32 %v813, %v890
        %v892 = vpop.f32.mrb[0].mxu0
        %v893 = vadd.f32 %v815, %v892
        %894 = vdwg.mxu0
        %v895 = vand.u32 %v486, 4294901760
        %896 = vmatprep.subr.mxu0 %v895
        %v897 = vand.u32 %v485, 4294901760
        %898 = vmatpush1.msra.mxu0 %v897
        %899 = vmatprep.subr.mxu0 0.0
        %900 = vmatpush1.msra.mxu0 0.0
        %901 = vmatprep.subr.mxu0 0.0
        %902 = vmatpush1.msra.mxu0 0.0
        %903 = vmatprep.subr.mxu0 0.0
        %904 = vmatpush1.msra.mxu0 0.0
        %905 = vmatprep.subr.mxu0 0.0
        %906 = vmatpush1.msra.mxu0 0.0
        %907 = vmatprep.subr.mxu0 0.0
        %908 = vmatpush1.msra.mxu0 0.0
        %909 = vmatprep.subr.mxu0 0.0
        %910 = vmatpush1.msra.mxu0 0.0
        %911 = vmatprep.subr.mxu0 0.0
        %912 = vmatpush1.msra.mxu0 0.0
        %913 = vmatprep.subr.mxu0 0.0
        %914 = vmatpush1.msra.mxu0 0.0
        %915 = vmatprep.subr.mxu0 0.0
        %916 = vmatpush1.msra.mxu0 0.0
        %917 = vmatprep.subr.mxu0 0.0
        %918 = vmatpush1.msra.mxu0 0.0
        %919 = vmatprep.subr.mxu0 0.0
        %920 = vmatpush1.msra.mxu0 0.0
        %921 = vmatprep.subr.mxu0 0.0
        %922 = vmatpush1.msra.mxu0 0.0
        %923 = vmatprep.subr.mxu0 0.0
        %924 = vmatpush1.msra.mxu0 0.0
        %925 = vmatprep.subr.mxu0 0.0
        %926 = vmatpush1.msra.mxu0 0.0
        %927 = vmatprep.subr.mxu0 0.0
        %928 = vmatpush1.msra.mxu0 0.0
        %929 = vmatprep.subr.mxu0 0.0
        %930 = vmatpush1.msra.mxu0 0.0
        %931 = vmatprep.subr.mxu0 0.0
        %932 = vmatpush1.msra.mxu0 0.0
        %933 = vmatprep.subr.mxu0 0.0
        %934 = vmatpush1.msra.mxu0 0.0
        %935 = vmatprep.subr.mxu0 0.0
        %936 = vmatpush1.msra.mxu0 0.0
        %937 = vmatprep.subr.mxu0 0.0
        %938 = vmatpush1.msra.mxu0 0.0
        %939 = vmatprep.subr.mxu0 0.0
        %940 = vmatpush1.msra.mxu0 0.0
        %941 = vmatprep.subr.mxu0 0.0
        %942 = vmatpush1.msra.mxu0 0.0
        %943 = vmatprep.subr.mxu0 0.0
        %944 = vmatpush1.msra.mxu0 0.0
        %945 = vmatprep.subr.mxu0 0.0
        %946 = vmatpush1.msra.mxu0 0.0
        %947 = vmatprep.subr.mxu0 0.0
        %948 = vmatpush1.msra.mxu0 0.0
        %949 = vmatprep.subr.mxu0 0.0
        %950 = vmatpush1.msra.mxu0 0.0
        %951 = vmatprep.subr.mxu0 0.0
        %952 = vmatpush1.msra.mxu0 0.0
        %953 = vmatprep.subr.mxu0 0.0
        %954 = vmatpush1.msra.mxu0 0.0
        %955 = vmatprep.subr.mxu0 0.0
        %956 = vmatpush1.msra.mxu0 0.0
        %957 = vmatprep.subr.mxu0 0.0
        %958 = vmatpush1.msra.mxu0 0.0
        %959 = vmatprep.subr.mxu0 0.0
        %960 = vmatpush1.msra.mxu0 0.0
        %961 = vmatprep.mubr.f32.mxu0 0.0
        %v962 = vand.u32 %v502, 4294901760
        %963 = vmatmul.mubr.f32.gmra.mrb[0].mxu0 %v962
        %v964 = vpop.f32.mrb[0].mxu0
        %v965 = vadd.f32 %v891, %v964
        %v966 = vpop.f32.mrb[0].mxu0
        %v967 = vadd.f32 %v893, %v966
        %968 = vdwg.mxu0
        %v969 = vand.u32 %v488, 4294901760
        %970 = vmatprep.subr.mxu0 %v969
        %v971 = vand.u32 %v487, 4294901760
        %972 = vmatpush1.msra.mxu0 %v971
        %973 = vmatprep.subr.mxu0 0.0
        %974 = vmatpush1.msra.mxu0 0.0
        %975 = vmatprep.subr.mxu0 0.0
        %976 = vmatpush1.msra.mxu0 0.0
        %977 = vmatprep.subr.mxu0 0.0
        %978 = vmatpush1.msra.mxu0 0.0
        %979 = vmatprep.subr.mxu0 0.0
        %980 = vmatpush1.msra.mxu0 0.0
        %981 = vmatprep.subr.mxu0 0.0
        %982 = vmatpush1.msra.mxu0 0.0
        %983 = vmatprep.subr.mxu0 0.0
        %984 = vmatpush1.msra.mxu0 0.0
        %985 = vmatprep.subr.mxu0 0.0
        %986 = vmatpush1.msra.mxu0 0.0
        %987 = vmatprep.subr.mxu0 0.0
        %988 = vmatpush1.msra.mxu0 0.0
        %989 = vmatprep.subr.mxu0 0.0
        %990 = vmatpush1.msra.mxu0 0.0
        %991 = vmatprep.subr.mxu0 0.0
        %992 = vmatpush1.msra.mxu0 0.0
        %993 = vmatprep.subr.mxu0 0.0
        %994 = vmatpush1.msra.mxu0 0.0
        %995 = vmatprep.subr.mxu0 0.0
        %996 = vmatpush1.msra.mxu0 0.0
        %997 = vmatprep.subr.mxu0 0.0
        %998 = vmatpush1.msra.mxu0 0.0
        %999 = vmatprep.subr.mxu0 0.0
        %1000 = vmatpush1.msra.mxu0 0.0
        %1001 = vmatprep.subr.mxu0 0.0
        %1002 = vmatpush1.msra.mxu0 0.0
        %1003 = vmatprep.subr.mxu0 0.0
        %1004 = vmatpush1.msra.mxu0 0.0
        %1005 = vmatprep.subr.mxu0 0.0
        %1006 = vmatpush1.msra.mxu0 0.0
        %1007 = vmatprep.subr.mxu0 0.0
        %1008 = vmatpush1.msra.mxu0 0.0
        %1009 = vmatprep.subr.mxu0 0.0
        %1010 = vmatpush1.msra.mxu0 0.0
        %1011 = vmatprep.subr.mxu0 0.0
        %1012 = vmatpush1.msra.mxu0 0.0
        %1013 = vmatprep.subr.mxu0 0.0
        %1014 = vmatpush1.msra.mxu0 0.0
        %1015 = vmatprep.subr.mxu0 0.0
        %1016 = vmatpush1.msra.mxu0 0.0
        %1017 = vmatprep.subr.mxu0 0.0
        %1018 = vmatpush1.msra.mxu0 0.0
        %1019 = vmatprep.subr.mxu0 0.0
        %1020 = vmatpush1.msra.mxu0 0.0
        %1021 = vmatprep.subr.mxu0 0.0
        %1022 = vmatpush1.msra.mxu0 0.0
        %1023 = vmatprep.subr.mxu0 0.0
        %1024 = vmatpush1.msra.mxu0 0.0
        %1025 = vmatprep.subr.mxu0 0.0
        %1026 = vmatpush1.msra.mxu0 0.0
        %1027 = vmatprep.subr.mxu0 0.0
        %1028 = vmatpush1.msra.mxu0 0.0
        %1029 = vmatprep.subr.mxu0 0.0
        %1030 = vmatpush1.msra.mxu0 0.0
        %1031 = vmatprep.subr.mxu0 0.0
        %1032 = vmatpush1.msra.mxu0 0.0
        %1033 = vmatprep.subr.mxu0 0.0
        %1034 = vmatpush1.msra.mxu0 0.0
        %1035 = vmatprep.mubr.f32.mxu0 0.0
        %v1036 = vand.u32 %v502, 4294901760
        %v1037 = vsub.f32 %v502, %v1036
        %v1038 = vand.u32 %v1037, 4294901760
        %v1039 = vsub.f32 %v1037, %v1038
        %v1040 = vand.u32 %v1039, 4294901760
        %1041 = vmatmul.mubr.f32.gmra.mrb[0].mxu0 %v1040
        %v1042 = vpop.f32.mrb[0].mxu0
        %v1043 = vadd.f32 %v499, %v1042
        %v1044 = vpop.f32.mrb[0].mxu0
        %v1045 = vadd.f32 %v499, %v1044
        %1046 = vdwg.mxu0
        %v1047 = vand.u32 %v488, 4294901760
        %v1048 = vsub.f32 %v488, %v1047
        %v1049 = vand.u32 %v1048, 4294901760
        %v1050 = vsub.f32 %v1048, %v1049
        %v1051 = vand.u32 %v1050, 4294901760
        %1052 = vmatprep.subr.mxu0 %v1051
        %v1053 = vand.u32 %v487, 4294901760
        %v1054 = vsub.f32 %v487, %v1053
        %v1055 = vand.u32 %v1054, 4294901760
        %v1056 = vsub.f32 %v1054, %v1055
        %v1057 = vand.u32 %v1056, 4294901760
        %1058 = vmatpush1.msra.mxu0 %v1057
        %1059 = vmatprep.subr.mxu0 0.0
        %1060 = vmatpush1.msra.mxu0 0.0
        %1061 = vmatprep.subr.mxu0 0.0
        %1062 = vmatpush1.msra.mxu0 0.0
        %1063 = vmatprep.subr.mxu0 0.0
        %1064 = vmatpush1.msra.mxu0 0.0
        %1065 = vmatprep.subr.mxu0 0.0
        %1066 = vmatpush1.msra.mxu0 0.0
        %1067 = vmatprep.subr.mxu0 0.0
        %1068 = vmatpush1.msra.mxu0 0.0
        %1069 = vmatprep.subr.mxu0 0.0
        %1070 = vmatpush1.msra.mxu0 0.0
        %1071 = vmatprep.subr.mxu0 0.0
        %1072 = vmatpush1.msra.mxu0 0.0
        %1073 = vmatprep.subr.mxu0 0.0
        %1074 = vmatpush1.msra.mxu0 0.0
        %1075 = vmatprep.subr.mxu0 0.0
        %1076 = vmatpush1.msra.mxu0 0.0
        %1077 = vmatprep.subr.mxu0 0.0
        %1078 = vmatpush1.msra.mxu0 0.0
        %1079 = vmatprep.subr.mxu0 0.0
        %1080 = vmatpush1.msra.mxu0 0.0
        %1081 = vmatprep.subr.mxu0 0.0
        %1082 = vmatpush1.msra.mxu0 0.0
        %1083 = vmatprep.subr.mxu0 0.0
        %1084 = vmatpush1.msra.mxu0 0.0
        %1085 = vmatprep.subr.mxu0 0.0
        %1086 = vmatpush1.msra.mxu0 0.0
        %1087 = vmatprep.subr.mxu0 0.0
        %1088 = vmatpush1.msra.mxu0 0.0
        %1089 = vmatprep.subr.mxu0 0.0
        %1090 = vmatpush1.msra.mxu0 0.0
        %1091 = vmatprep.subr.mxu0 0.0
        %1092 = vmatpush1.msra.mxu0 0.0
        %1093 = vmatprep.subr.mxu0 0.0
        %1094 = vmatpush1.msra.mxu0 0.0
        %1095 = vmatprep.subr.mxu0 0.0
        %1096 = vmatpush1.msra.mxu0 0.0
        %1097 = vmatprep.subr.mxu0 0.0
        %1098 = vmatpush1.msra.mxu0 0.0
        %1099 = vmatprep.subr.mxu0 0.0
        %1100 = vmatpush1.msra.mxu0 0.0
        %1101 = vmatprep.subr.mxu0 0.0
        %1102 = vmatpush1.msra.mxu0 0.0
        %1103 = vmatprep.subr.mxu0 0.0
        %1104 = vmatpush1.msra.mxu0 0.0
        %1105 = vmatprep.subr.mxu0 0.0
        %1106 = vmatpush1.msra.mxu0 0.0
        %1107 = vmatprep.subr.mxu0 0.0
        %1108 = vmatpush1.msra.mxu0 0.0
        %1109 = vmatprep.subr.mxu0 0.0
        %1110 = vmatpush1.msra.mxu0 0.0
        %1111 = vmatprep.subr.mxu0 0.0
        %1112 = vmatpush1.msra.mxu0 0.0
        %1113 = vmatprep.subr.mxu0 0.0
        %1114 = vmatpush1.msra.mxu0 0.0
        %1115 = vmatprep.subr.mxu0 0.0
        %1116 = vmatpush1.msra.mxu0 0.0
        %1117 = vmatprep.subr.mxu0 0.0
        %1118 = vmatpush1.msra.mxu0 0.0
        %1119 = vmatprep.subr.mxu0 0.0
        %1120 = vmatpush1.msra.mxu0 0.0
        %1121 = vmatprep.mubr.f32.mxu0 0.0
        %v1122 = vand.u32 %v502, 4294901760
        %1123 = vmatmul.mubr.f32.gmra.mrb[0].mxu0 %v1122
        %v1124 = vpop.f32.mrb[0].mxu0
        %v1125 = vadd.f32 %v1043, %v1124
        %v1126 = vpop.f32.mrb[0].mxu0
        %v1127 = vadd.f32 %v1045, %v1126
        %1128 = vdwg.mxu0
        %v1129 = vand.u32 %v488, 4294901760
        %v1130 = vsub.f32 %v488, %v1129
        %1131 = vmatprep.subr.mxu0 %v1130
        %v1132 = vand.u32 %v487, 4294901760
        %v1133 = vsub.f32 %v487, %v1132
        %1134 = vmatpush1.msra.mxu0 %v1133
        %1135 = vmatprep.subr.mxu0 0.0
        %1136 = vmatpush1.msra.mxu0 0.0
        %1137 = vmatprep.subr.mxu0 0.0
        %1138 = vmatpush1.msra.mxu0 0.0
        %1139 = vmatprep.subr.mxu0 0.0
        %1140 = vmatpush1.msra.mxu0 0.0
        %1141 = vmatprep.subr.mxu0 0.0
        %1142 = vmatpush1.msra.mxu0 0.0
        %1143 = vmatprep.subr.mxu0 0.0
        %1144 = vmatpush1.msra.mxu0 0.0
        %1145 = vmatprep.subr.mxu0 0.0
        %1146 = vmatpush1.msra.mxu0 0.0
        %1147 = vmatprep.subr.mxu0 0.0
        %1148 = vmatpush1.msra.mxu0 0.0
        %1149 = vmatprep.subr.mxu0 0.0
        %1150 = vmatpush1.msra.mxu0 0.0
        %1151 = vmatprep.subr.mxu0 0.0
        %1152 = vmatpush1.msra.mxu0 0.0
        %1153 = vmatprep.subr.mxu0 0.0
        %1154 = vmatpush1.msra.mxu0 0.0
        %1155 = vmatprep.subr.mxu0 0.0
        %1156 = vmatpush1.msra.mxu0 0.0
        %1157 = vmatprep.subr.mxu0 0.0
        %1158 = vmatpush1.msra.mxu0 0.0
        %1159 = vmatprep.subr.mxu0 0.0
        %1160 = vmatpush1.msra.mxu0 0.0
        %1161 = vmatprep.subr.mxu0 0.0
        %1162 = vmatpush1.msra.mxu0 0.0
        %1163 = vmatprep.subr.mxu0 0.0
        %1164 = vmatpush1.msra.mxu0 0.0
        %1165 = vmatprep.subr.mxu0 0.0
        %1166 = vmatpush1.msra.mxu0 0.0
        %1167 = vmatprep.subr.mxu0 0.0
        %1168 = vmatpush1.msra.mxu0 0.0
        %1169 = vmatprep.subr.mxu0 0.0
        %1170 = vmatpush1.msra.mxu0 0.0
        %1171 = vmatprep.subr.mxu0 0.0
        %1172 = vmatpush1.msra.mxu0 0.0
        %1173 = vmatprep.subr.mxu0 0.0
        %1174 = vmatpush1.msra.mxu0 0.0
        %1175 = vmatprep.subr.mxu0 0.0
        %1176 = vmatpush1.msra.mxu0 0.0
        %1177 = vmatprep.subr.mxu0 0.0
        %1178 = vmatpush1.msra.mxu0 0.0
        %1179 = vmatprep.subr.mxu0 0.0
        %1180 = vmatpush1.msra.mxu0 0.0
        %1181 = vmatprep.subr.mxu0 0.0
        %1182 = vmatpush1.msra.mxu0 0.0
        %1183 = vmatprep.subr.mxu0 0.0
        %1184 = vmatpush1.msra.mxu0 0.0
        %1185 = vmatprep.subr.mxu0 0.0
        %1186 = vmatpush1.msra.mxu0 0.0
        %1187 = vmatprep.subr.mxu0 0.0
        %1188 = vmatpush1.msra.mxu0 0.0
        %1189 = vmatprep.subr.mxu0 0.0
        %1190 = vmatpush1.msra.mxu0 0.0
        %1191 = vmatprep.subr.mxu0 0.0
        %1192 = vmatpush1.msra.mxu0 0.0
        %1193 = vmatprep.subr.mxu0 0.0
        %1194 = vmatpush1.msra.mxu0 0.0
        %1195 = vmatprep.subr.mxu0 0.0
        %1196 = vmatpush1.msra.mxu0 0.0
        %1197 = vmatprep.mubr.f32.mxu0 0.0
        %v1198 = vand.u32 %v502, 4294901760
        %v1199 = vsub.f32 %v502, %v1198
        %1200 = vmatmul.mubr.f32.gmra.mrb[0].mxu0 %v1199
        %v1201 = vpop.f32.mrb[0].mxu0
        %v1202 = vadd.f32 %v1125, %v1201
        %v1203 = vpop.f32.mrb[0].mxu0
        %v1204 = vadd.f32 %v1127, %v1203
        %1205 = vdwg.mxu0
        %v1206 = vand.u32 %v488, 4294901760
        %1207 = vmatprep.subr.mxu0 %v1206
        %v1208 = vand.u32 %v487, 4294901760
        %1209 = vmatpush1.msra.mxu0 %v1208
        %1210 = vmatprep.subr.mxu0 0.0
        %1211 = vmatpush1.msra.mxu0 0.0
        %1212 = vmatprep.subr.mxu0 0.0
        %1213 = vmatpush1.msra.mxu0 0.0
        %1214 = vmatprep.subr.mxu0 0.0
        %1215 = vmatpush1.msra.mxu0 0.0
        %1216 = vmatprep.subr.mxu0 0.0
        %1217 = vmatpush1.msra.mxu0 0.0
        %1218 = vmatprep.subr.mxu0 0.0
        %1219 = vmatpush1.msra.mxu0 0.0
        %1220 = vmatprep.subr.mxu0 0.0
        %1221 = vmatpush1.msra.mxu0 0.0
        %1222 = vmatprep.subr.mxu0 0.0
        %1223 = vmatpush1.msra.mxu0 0.0
        %1224 = vmatprep.subr.mxu0 0.0
        %1225 = vmatpush1.msra.mxu0 0.0
        %1226 = vmatprep.subr.mxu0 0.0
        %1227 = vmatpush1.msra.mxu0 0.0
        %1228 = vmatprep.subr.mxu0 0.0
        %1229 = vmatpush1.msra.mxu0 0.0
        %1230 = vmatprep.subr.mxu0 0.0
        %1231 = vmatpush1.msra.mxu0 0.0
        %1232 = vmatprep.subr.mxu0 0.0
        %1233 = vmatpush1.msra.mxu0 0.0
        %1234 = vmatprep.subr.mxu0 0.0
        %1235 = vmatpush1.msra.mxu0 0.0
        %1236 = vmatprep.subr.mxu0 0.0
        %1237 = vmatpush1.msra.mxu0 0.0
        %1238 = vmatprep.subr.mxu0 0.0
        %1239 = vmatpush1.msra.mxu0 0.0
        %1240 = vmatprep.subr.mxu0 0.0
        %1241 = vmatpush1.msra.mxu0 0.0
        %1242 = vmatprep.subr.mxu0 0.0
        %1243 = vmatpush1.msra.mxu0 0.0
        %1244 = vmatprep.subr.mxu0 0.0
        %1245 = vmatpush1.msra.mxu0 0.0
        %1246 = vmatprep.subr.mxu0 0.0
        %1247 = vmatpush1.msra.mxu0 0.0
        %1248 = vmatprep.subr.mxu0 0.0
        %1249 = vmatpush1.msra.mxu0 0.0
        %1250 = vmatprep.subr.mxu0 0.0
        %1251 = vmatpush1.msra.mxu0 0.0
        %1252 = vmatprep.subr.mxu0 0.0
        %1253 = vmatpush1.msra.mxu0 0.0
        %1254 = vmatprep.subr.mxu0 0.0
        %1255 = vmatpush1.msra.mxu0 0.0
        %1256 = vmatprep.subr.mxu0 0.0
        %1257 = vmatpush1.msra.mxu0 0.0
        %1258 = vmatprep.subr.mxu0 0.0
        %1259 = vmatpush1.msra.mxu0 0.0
        %1260 = vmatprep.subr.mxu0 0.0
        %1261 = vmatpush1.msra.mxu0 0.0
        %1262 = vmatprep.subr.mxu0 0.0
        %1263 = vmatpush1.msra.mxu0 0.0
        %1264 = vmatprep.subr.mxu0 0.0
        %1265 = vmatpush1.msra.mxu0 0.0
        %1266 = vmatprep.subr.mxu0 0.0
        %1267 = vmatpush1.msra.mxu0 0.0
        %1268 = vmatprep.subr.mxu0 0.0
        %1269 = vmatpush1.msra.mxu0 0.0
        %1270 = vmatprep.subr.mxu0 0.0
        %1271 = vmatpush1.msra.mxu0 0.0
        %1272 = vmatprep.mubr.f32.mxu0 0.0
        %v1273 = vand.u32 %v502, 4294901760
        %v1274 = vsub.f32 %v502, %v1273
        %v1275 = vand.u32 %v1274, 4294901760
        %1276 = vmatmul.mubr.f32.gmra.mrb[0].mxu0 %v1275
        %v1277 = vpop.f32.mrb[0].mxu0
        %v1278 = vadd.f32 %v1202, %v1277
        %v1279 = vpop.f32.mrb[0].mxu0
        %v1280 = vadd.f32 %v1204, %v1279
        %1281 = vdwg.mxu0
        %v1282 = vand.u32 %v488, 4294901760
        %v1283 = vsub.f32 %v488, %v1282
        %v1284 = vand.u32 %v1283, 4294901760
        %1285 = vmatprep.subr.mxu0 %v1284
        %v1286 = vand.u32 %v487, 4294901760
        %v1287 = vsub.f32 %v487, %v1286
        %v1288 = vand.u32 %v1287, 4294901760
        %1289 = vmatpush1.msra.mxu0 %v1288
        %1290 = vmatprep.subr.mxu0 0.0
        %1291 = vmatpush1.msra.mxu0 0.0
        %1292 = vmatprep.subr.mxu0 0.0
        %1293 = vmatpush1.msra.mxu0 0.0
        %1294 = vmatprep.subr.mxu0 0.0
        %1295 = vmatpush1.msra.mxu0 0.0
        %1296 = vmatprep.subr.mxu0 0.0
        %1297 = vmatpush1.msra.mxu0 0.0
        %1298 = vmatprep.subr.mxu0 0.0
        %1299 = vmatpush1.msra.mxu0 0.0
        %1300 = vmatprep.subr.mxu0 0.0
        %1301 = vmatpush1.msra.mxu0 0.0
        %1302 = vmatprep.subr.mxu0 0.0
        %1303 = vmatpush1.msra.mxu0 0.0
        %1304 = vmatprep.subr.mxu0 0.0
        %1305 = vmatpush1.msra.mxu0 0.0
        %1306 = vmatprep.subr.mxu0 0.0
        %1307 = vmatpush1.msra.mxu0 0.0
        %1308 = vmatprep.subr.mxu0 0.0
        %1309 = vmatpush1.msra.mxu0 0.0
        %1310 = vmatprep.subr.mxu0 0.0
        %1311 = vmatpush1.msra.mxu0 0.0
        %1312 = vmatprep.subr.mxu0 0.0
        %1313 = vmatpush1.msra.mxu0 0.0
        %1314 = vmatprep.subr.mxu0 0.0
        %1315 = vmatpush1.msra.mxu0 0.0
        %1316 = vmatprep.subr.mxu0 0.0
        %1317 = vmatpush1.msra.mxu0 0.0
        %1318 = vmatprep.subr.mxu0 0.0
        %1319 = vmatpush1.msra.mxu0 0.0
        %1320 = vmatprep.subr.mxu0 0.0
        %1321 = vmatpush1.msra.mxu0 0.0
        %1322 = vmatprep.subr.mxu0 0.0
        %1323 = vmatpush1.msra.mxu0 0.0
        %1324 = vmatprep.subr.mxu0 0.0
        %1325 = vmatpush1.msra.mxu0 0.0
        %1326 = vmatprep.subr.mxu0 0.0
        %1327 = vmatpush1.msra.mxu0 0.0
        %1328 = vmatprep.subr.mxu0 0.0
        %1329 = vmatpush1.msra.mxu0 0.0
        %1330 = vmatprep.subr.mxu0 0.0
        %1331 = vmatpush1.msra.mxu0 0.0
        %1332 = vmatprep.subr.mxu0 0.0
        %1333 = vmatpush1.msra.mxu0 0.0
        %1334 = vmatprep.subr.mxu0 0.0
        %1335 = vmatpush1.msra.mxu0 0.0
        %1336 = vmatprep.subr.mxu0 0.0
        %1337 = vmatpush1.msra.mxu0 0.0
        %1338 = vmatprep.subr.mxu0 0.0
        %1339 = vmatpush1.msra.mxu0 0.0
        %1340 = vmatprep.subr.mxu0 0.0
        %1341 = vmatpush1.msra.mxu0 0.0
        %1342 = vmatprep.subr.mxu0 0.0
        %1343 = vmatpush1.msra.mxu0 0.0
        %1344 = vmatprep.subr.mxu0 0.0
        %1345 = vmatpush1.msra.mxu0 0.0
        %1346 = vmatprep.subr.mxu0 0.0
        %1347 = vmatpush1.msra.mxu0 0.0
        %1348 = vmatprep.subr.mxu0 0.0
        %1349 = vmatpush1.msra.mxu0 0.0
        %1350 = vmatprep.subr.mxu0 0.0
        %1351 = vmatpush1.msra.mxu0 0.0
        %1352 = vmatprep.mubr.f32.mxu0 0.0
        %v1353 = vand.u32 %v502, 4294901760
        %1354 = vmatmul.mubr.f32.gmra.mrb[0].mxu0 %v1353
        %v1355 = vpop.f32.mrb[0].mxu0
        %v1356 = vadd.f32 %v1278, %v1355
        %v1357 = vpop.f32.mrb[0].mxu0
        %v1358 = vadd.f32 %v1280, %v1357
        %1359 = vdwg.mxu0
        %v1360 = vand.u32 %v488, 4294901760
        %1361 = vmatprep.subr.mxu0 %v1360
        %v1362 = vand.u32 %v487, 4294901760
        %1363 = vmatpush1.msra.mxu0 %v1362
        %1364 = vmatprep.subr.mxu0 0.0
        %1365 = vmatpush1.msra.mxu0 0.0
        %1366 = vmatprep.subr.mxu0 0.0
        %1367 = vmatpush1.msra.mxu0 0.0
        %1368 = vmatprep.subr.mxu0 0.0
        %1369 = vmatpush1.msra.mxu0 0.0
        %1370 = vmatprep.subr.mxu0 0.0
        %1371 = vmatpush1.msra.mxu0 0.0
        %1372 = vmatprep.subr.mxu0 0.0
        %1373 = vmatpush1.msra.mxu0 0.0
        %1374 = vmatprep.subr.mxu0 0.0
        %1375 = vmatpush1.msra.mxu0 0.0
        %1376 = vmatprep.subr.mxu0 0.0
        %1377 = vmatpush1.msra.mxu0 0.0
        %1378 = vmatprep.subr.mxu0 0.0
        %1379 = vmatpush1.msra.mxu0 0.0
        %1380 = vmatprep.subr.mxu0 0.0
        %1381 = vmatpush1.msra.mxu0 0.0
        %1382 = vmatprep.subr.mxu0 0.0
        %1383 = vmatpush1.msra.mxu0 0.0
        %1384 = vmatprep.subr.mxu0 0.0
        %1385 = vmatpush1.msra.mxu0 0.0
        %1386 = vmatprep.subr.mxu0 0.0
        %1387 = vmatpush1.msra.mxu0 0.0
        %1388 = vmatprep.subr.mxu0 0.0
        %1389 = vmatpush1.msra.mxu0 0.0
        %1390 = vmatprep.subr.mxu0 0.0
        %1391 = vmatpush1.msra.mxu0 0.0
        %1392 = vmatprep.subr.mxu0 0.0
        %1393 = vmatpush1.msra.mxu0 0.0
        %1394 = vmatprep.subr.mxu0 0.0
        %1395 = vmatpush1.msra.mxu0 0.0
        %1396 = vmatprep.subr.mxu0 0.0
        %1397 = vmatpush1.msra.mxu0 0.0
        %1398 = vmatprep.subr.mxu0 0.0
        %1399 = vmatpush1.msra.mxu0 0.0
        %1400 = vmatprep.subr.mxu0 0.0
        %1401 = vmatpush1.msra.mxu0 0.0
        %1402 = vmatprep.subr.mxu0 0.0
        %1403 = vmatpush1.msra.mxu0 0.0
        %1404 = vmatprep.subr.mxu0 0.0
        %1405 = vmatpush1.msra.mxu0 0.0
        %1406 = vmatprep.subr.mxu0 0.0
        %1407 = vmatpush1.msra.mxu0 0.0
        %1408 = vmatprep.subr.mxu0 0.0
        %1409 = vmatpush1.msra.mxu0 0.0
        %1410 = vmatprep.subr.mxu0 0.0
        %1411 = vmatpush1.msra.mxu0 0.0
        %1412 = vmatprep.subr.mxu0 0.0
        %1413 = vmatpush1.msra.mxu0 0.0
        %1414 = vmatprep.subr.mxu0 0.0
        %1415 = vmatpush1.msra.mxu0 0.0
        %1416 = vmatprep.subr.mxu0 0.0
        %1417 = vmatpush1.msra.mxu0 0.0
        %1418 = vmatprep.subr.mxu0 0.0
        %1419 = vmatpush1.msra.mxu0 0.0
        %1420 = vmatprep.subr.mxu0 0.0
        %1421 = vmatpush1.msra.mxu0 0.0
        %1422 = vmatprep.subr.mxu0 0.0
        %1423 = vmatpush1.msra.mxu0 0.0
        %1424 = vmatprep.subr.mxu0 0.0
        %1425 = vmatpush1.msra.mxu0 0.0
        %1426 = vmatprep.mubr.f32.mxu0 0.0
        %v1427 = vand.u32 %v502, 4294901760
        %1428 = vmatmul.mubr.f32.gmra.mrb[0].mxu0 %v1427
        %v1429 = vpop.f32.mrb[0].mxu0
        %v1430 = vadd.f32 %v1356, %v1429
        %v1431 = vpop.f32.mrb[0].mxu0
        %v1432 = vadd.f32 %v1358, %v1431
        %1433 = vdwg.mxu0
        %v1434 = vxor.u32 %v965, 2147483648
        %v1435 = vxor.u32 %v967, 2147483648
        %v1436 = vxor.u32 %v1430, 2147483648
        %v1437 = vxor.u32 %v1432, 2147483648
        %v1438 = vmul.f32 %v1434, 1.442695
        %v1439 = vpow.pop %v1438
        %v1440 = vmul.f32 %v1435, 1.442695
        %v1441 = vpow.pop %v1440
        %v1442 = vmul.f32 %v1436, 1.442695
        %v1443 = vpow.pop %v1442
        %v1444 = vmul.f32 %v1437, 1.442695
        %v1445 = vpow.pop %v1444
        %v1446 = vadd.f32 %v1439, 1.0
        %v1447 = vadd.f32 %v1441, 1.0
        %v1448 = vadd.f32 %v1443, 1.0
        %v1449 = vadd.f32 %v1445, 1.0
        %v1450 = vrcp.pop %v1446
        %v1451 = vmul.f32 1.0, %v1450
        %v1452 = vrcp.pop %v1447
        %v1453 = vmul.f32 1.0, %v1452
        %v1454 = vrcp.pop %v1448
        %v1455 = vmul.f32 1.0, %v1454
        %v1456 = vrcp.pop %v1449
        %v1457 = vmul.f32 1.0, %v1456
        %v1462 = vcombine.low %v1451, %v1453
        %v1463 = vcombine.low %v1455, %v1457
        %v1465 = vunpack.c.l.s4 1966171168
        %v1466 = vunpack.c.0.s8 %v1465
        %v1467 = vlaneseq
        %v1468 = vshrl.u32 %v1467, 7
        %v1469 = vsub.s32 %v1466, %v1468
        %v1470 = vrot.slane %v1462, %v1469
        %v1472 = vunpack.c.l.s4 1966171168
        %v1473 = vunpack.c.0.s8 %v1472
        %v1474 = vlaneseq
        %v1475 = vshrl.u32 %v1474, 7
        %v1476 = vsub.s32 %v1473, %v1475
        %v1477 = vrot.slane %v1463, %v1476
        %v1478 = vcombine.low %v1470, %v1477
        %v1480 = vunpack.c.l.s4 1966171168
        %v1481 = vunpack.c.0.s8 %v1480
        %v1482 = vlaneseq
        %v1483 = vshrl.u32 %v1482, 7
        %v1484 = vsub.s32 %v1481, %v1483
        %v1485 = vrot.slane %v1478, %v1484
        %v1487 = vlaneseq
        %vm1488 = vcmp.ge.s32.totalorder %v1487, 0
        %vm1489 = vcmp.lt.s32.totalorder %v1487, 512
        %vm1490 = vmand %vm1488, %vm1489
        %1491 = vst.msk [vmem:[%s415] sm:$0xf] %vm1490, %v1485
        %s1492 = sand.u32 %s202, 1
        %s1493 = scalar_lea.sflag [#allocation4], %s1492
        %s1494 = sand.u32 %s202, 1
        %s1495 = smul.addr %s1494, 4
        %s1496 = scalar_lea.vmem [#allocation7], %s1495
        // Predicated region
        $region45: #{tpu_custom_call.1} parent=35 // pred_check
          %p1497 = pneg %p212
        $region46: #{tpu_custom_call.1} parent=35 // pred_check_branch
          %1499 = sbr.rel (%p1497) target = $region48
        $region47: #{tpu_custom_call.1} parent=35 // pred_region
          %s1500 = smul.u32 4, %s29
          %s1502 = ssub.s32 64, 64
          %1503 = vsyncadd %s1493, %s1502
          %s1504 = smul.addr %s28, 4
          %s1505 = sadd.s32 %s1500, %s1504
          %s1506 = smul.addr %s1505, 16
          %s1507 = scalar_lea.hbm %s4, %s1506
          %s1509 = sshll.u32 %s1496, 4
          %s1510 = int_to_ptr.vmem [resolvable:$true] %s1509
          %1512 = dma.vmem_to_hbm [thread:$0]  %s1510, 64, %s1507, %s1493
        $region48: #{tpu_custom_call.1} parent=35 // pred_fallthru
          _
      $region36: #{tpu_custom_call.1} parent=5 // pred_fallthru
        _
      %p1513 = scmp.le.s32.totalorder 2, %s19
      // Predicated region
      $region49: #{tpu_custom_call.1} parent=5 // pred_check
        %p1514 = pneg %p1513
      $region50: #{tpu_custom_call.1} parent=5 // pred_check_branch
        %1516 = sbr.rel (%p1514) target = $region52
      $region51: #{tpu_custom_call.1} parent=5 // pred_region
        %s1517 = ssub.s32 %s19, 2
        // Predicated region
        $region53: #{tpu_custom_call.1} parent=51 // pred_check
          %p1518 = pneg %p218
        $region54: #{tpu_custom_call.1} parent=51 // pred_check_branch
          %1520 = sbr.rel (%p1518) target = $region56
        $region55: #{tpu_custom_call.1} parent=51 // pred_region
          %s1521 = sand.u32 %s203, 1
          %s1522 = scalar_lea.sflag [#allocation4], %s1521
          %s1523 = sand.u32 %s203, 1
          %s1524 = smul.addr %s1523, 4
          %s1525 = scalar_lea.vmem [#allocation7], %s1524
          %1526 = dma.done %s1522, 64
        $region56: #{tpu_custom_call.1} parent=51 // pred_fallthru
          _
      $region52: #{tpu_custom_call.1} parent=5 // pred_fallthru
        _
    $region6: #{tpu_custom_call.1} parent=1 // loop_footer
      %s23 = sadd.s32 1, %s19
    $region7: #{tpu_custom_call.1} parent=1 // loop_footer_branch
      %18 = sbr.rel target = $region3
    $region8: #{tpu_custom_call.1} parent=1 // loop_exit
      _
    %1527 = vsyncpa [#allocation3], 1
    %s1528 = scalar_lea.sflag [#allocation3], 1
    %1529 = vsyncpa %s1528, 1
    %1530 = vsyncpa [#allocation6], 1
    %s1531 = scalar_lea.sflag [#allocation6], 1
    %1532 = vsyncpa %s1531, 1
    %1533 = vsyncpa [#allocation4], 1
    %s1534 = scalar_lea.sflag [#allocation4], 1
    %1535 = vsyncpa %s1534, 1

</llo_original>
